<compile_context>
chip_gen: v7x
topology: tpu7x:2x2x1
jax: 0.10.0
libtpu: 0.0.40
codegen_flags: <defaults>
</compile_context>

<pallas_src>
import math

import jax
import jax.numpy as jnp
from jax.experimental import pallas as pl
from jax.experimental.pallas import tpu as pltpu


# ----------------------------- model dims -----------------------------------
B = 2        # batch
N = 8        # number of graph nodes (sequence length)
H = 32       # hidden_size
NH = 4       # num_attention_heads
DH = H // NH # attention_head_size
BN_EPS = 1e-5


# ------------------------------- kernel -------------------------------------
def gat_layer_kernel(x_ref, w_ref, b_ref, bn_ref, o_ref):
    """Single-invocation fused GAT layer.

    x_ref  : (B*N, H)  all node features, batch flattened
    w_ref  : (H, 6H)   [Wq | Wk | Wv | W_in | W_int | W_out]  (stored as (in, out))
    b_ref  : (2, 3H)   row0 = [bq | bk | bv], row1 = [b_in | b_int | b_out]
    bn_ref : (4, H)    [scale1; shift1; scale2; shift2]  (folded eval-mode BN)
    o_ref  : (B*N, H)
    """
    x = x_ref[...].astype(jnp.float32)                                   # (BN, H)

    # ---- fused QKV projection: one MXU matmul + one bias broadcast-add ----
    qkv = jnp.dot(x, w_ref[:, 0:3 * H],
                  preferred_element_type=jnp.float32) + b_ref[0:1, :]    # (BN, 3H)
    q = qkv[:, 0:H]
    k = qkv[:, H:2 * H]
    v = qkv[:, 2 * H:3 * H]

    # ---- per-head scaled dot-product attention, batched over the batch dim ----
    inv_sqrt_dh = 1.0 / math.sqrt(DH)
    head_outs = []
    for h in range(NH):                                  # static loop, NH = 4
        lo = h * DH
        qh = q[:, lo:lo + DH].reshape(B, N, DH)          # (B, N, DH)
        kh = k[:, lo:lo + DH].reshape(B, N, DH)
        vh = v[:, lo:lo + DH].reshape(B, N, DH)
        s = jnp.einsum('bnd,bmd->bnm', qh, kh,
                       preferred_element_type=jnp.float32) * inv_sqrt_dh  # (B, N, N)
        s = s - jnp.max(s, axis=-1, keepdims=True)
        e = jnp.exp(s)
        p = e * pl.reciprocal(jnp.sum(e, axis=-1, keepdims=True), approx=True)
        oh = jnp.einsum('bnm,bmd->bnd', p, vh,
                        preferred_element_type=jnp.float32)               # (B, N, DH)
        head_outs.append(oh.reshape(B * N, DH))
    mha = jnp.concatenate(head_outs, axis=-1)             # (BN, H), kept in vregs

    # ---- in_fc + residual + in_bn (folded affine) ----
    attn = jnp.dot(mha, w_ref[:, 3 * H:4 * H],
                   preferred_element_type=jnp.float32) + b_ref[1:2, 0:H]
    attn = (attn + x) * bn_ref[0:1, :] + bn_ref[1:2, :]

    # ---- intermediate_fc + relu + out_fc ----
    inter = jnp.dot(attn, w_ref[:, 4 * H:5 * H],
                    preferred_element_type=jnp.float32) + b_ref[1:2, H:2 * H]
    inter = jnp.maximum(inter, 0.0)
    out = jnp.dot(inter, w_ref[:, 5 * H:6 * H],
                  preferred_element_type=jnp.float32) + b_ref[1:2, 2 * H:3 * H]

    # ---- residual + out_bn (folded affine) ----
    out = (out + attn) * bn_ref[2:3, :] + bn_ref[3:4, :]

    o_ref[...] = out.astype(o_ref.dtype)


# ------------------------------- wrapper -------------------------------------
@jax.jit
def gat_layer_pallas(x, params):
    (wq, bq, wk, bk, wv, bv,
     win, bin_, s1, t1,
     wint, bint, wout, bout, s2, t2) = params

    # Coalesce the 16 parameter arrays into 3 packed slabs (few, larger DMAs).
    w_slab = jnp.concatenate([wq, wk, wv, win, wint, wout], axis=1)       # (H, 6H)
    b_slab = jnp.concatenate(
        [jnp.concatenate([bq, bk, bv], axis=1),
         jnp.concatenate([bin_, bint, bout], axis=1)], axis=0)            # (2, 3H)
    bn_slab = jnp.concatenate([s1, t1, s2, t2], axis=0)                   # (4, H)

    x2 = x.reshape(B * N, H)                                              # (16, 32)

    out = pl.pallas_call(
        gat_layer_kernel,
        out_shape=jax.ShapeDtypeStruct((B * N, H), x.dtype),
        in_specs=[pl.BlockSpec(memory_space=pltpu.MemorySpace.VMEM)
                  for _ in range(4)],
        out_specs=pl.BlockSpec(memory_space=pltpu.MemorySpace.VMEM),
    )(x2, w_slab, b_slab, bn_slab)
    return out.reshape(B, N, H)


# --------------------------- pure-JAX reference ------------------------------
def gat_layer_ref(x, params):
    (wq, bq, wk, bk, wv, bv,
     win, bin_, s1, t1,
     wint, bint, wout, bout, s2, t2) = params

    def mha(g):
        q = g @ wq + bq
        k = g @ wk + bk
        v = g @ wv + bv
        def split(t):  # (B,N,H) -> (B,NH,N,DH)
            return t.reshape(B, N, NH, DH).transpose(0, 2, 1, 3)
        qh, kh, vh = split(q), split(k), split(v)
        scores = jnp.einsum('bhnd,bhmd->bhnm', qh, kh) / math.sqrt(DH)
        probs = jax.nn.softmax(scores, axis=-1)
        o = jnp.einsum('bhnm,bhmd->bhnd', probs, vh)
        return o.transpose(0, 2, 1, 3).reshape(B, N, H)

    a = mha(x)
    a = a @ win + bin_
    a = (a + x) * s1 + t1
    i = jax.nn.relu(a @ wint + bint)
    o = i @ wout + bout
    o = (o + a) * s2 + t2
    return o


# ----------------------------- param builders --------------------------------
def make_params(key):
    keys = jax.random.split(key, 16)

    def lin(kw, kb):
        w = jax.random.normal(kw, (H, H), jnp.float32) * 0.05   # stored (in, out)
        b = jax.random.normal(kb, (1, H), jnp.float32) * 0.05
        return w, b

    wq, bq = lin(keys[0], keys[1])
    wk, bk = lin(keys[2], keys[3])
    wv, bv = lin(keys[4], keys[5])
    win, bin_ = lin(keys[6], keys[7])
    wint, bint = lin(keys[8], keys[9])
    wout, bout = lin(keys[10], keys[11])

    def bn(kg, kb, km, kv):
        gamma = 1.0 + 0.1 * jax.random.normal(kg, (1, H), jnp.float32)
        beta = 0.1 * jax.random.normal(kb, (1, H), jnp.float32)
        run_mean = 0.1 * jax.random.normal(km, (1, H), jnp.float32)
        run_var = 1.0 + 0.1 * jnp.abs(jax.random.normal(kv, (1, H), jnp.float32))
        scale = gamma / jnp.sqrt(run_var + BN_EPS)        # folded eval-mode BN
        shift = beta - run_mean * scale
        return scale, shift

    s1, t1 = bn(keys[12], keys[13], keys[14], keys[15])
    k2 = jax.random.split(keys[15], 4)
    s2, t2 = bn(k2[0], k2[1], k2[2], k2[3])

    return (wq, bq, wk, bk, wv, bv, win, bin_, s1, t1,
            wint, bint, wout, bout, s2, t2)


# --------------------------------- main ---------------------------------------
if __name__ == "__main__":
    key = jax.random.PRNGKey(0)
    kx, kp = jax.random.split(key)
    x = jax.random.normal(kx, (B, N, H), jnp.float32)
    params = make_params(kp)

    out = gat_layer_pallas(x, params)
    out = jax.block_until_ready(out)

    ref = gat_layer_ref(x, params)
    assert out.shape == (B, N, H)
    # Tolerance accounts for the EUP approximate reciprocal in the softmax and
    # MXU precision differences vs. the XLA reference path.
    err = jnp.max(jnp.abs(out - ref))
    assert jnp.allclose(out, ref, rtol=2e-3, atol=2e-3), f"max abs err {err}"

    print("KERNEL_OK")
</pallas_src>

<mosaic_0001>
module attributes {stable_mosaic.version = 11 : i64} {
  func.func @gat_layer_kernel(%arg0: memref<16x32xf32, #tpu.memory_space<vmem>>, %arg1: memref<32x192xf32, #tpu.memory_space<vmem>>, %arg2: memref<2x96xf32, #tpu.memory_space<vmem>>, %arg3: memref<4x32xf32, #tpu.memory_space<vmem>>, %arg4: memref<16x32xf32, #tpu.memory_space<vmem>>) attributes {dimension_semantics = [], scalar_prefetch = 0 : i64, scratch_operands = 0 : i64, tpu.core_type = #tpu.core_type<tc>} {
    %c0 = arith.constant 0 : index
    %c0_0 = arith.constant 0 : index
    %0 = vector.load %arg0[%c0, %c0_0] : memref<16x32xf32, #tpu.memory_space<vmem>>, vector<16x32xf32>
    %c0_1 = arith.constant 0 : index
    %c0_2 = arith.constant 0 : index
    %1 = vector.load %arg1[%c0_1, %c0_2] : memref<32x192xf32, #tpu.memory_space<vmem>>, vector<32x96xf32>
    %cst = arith.constant dense<0.000000e+00> : vector<16x96xf32>
    %2 = tpu.matmul %0, %1, %cst {dimension_numbers = #tpu.dot_dimension_numbers<[1], [0], [0], [1], [0, 0, 1, 1], [], []>} : vector<16x32xf32>, vector<32x96xf32>, vector<16x96xf32> -> vector<16x96xf32>
    %c0_3 = arith.constant 0 : index
    %c0_4 = arith.constant 0 : index
    %3 = vector.load %arg2[%c0_3, %c0_4] : memref<2x96xf32, #tpu.memory_space<vmem>>, vector<1x96xf32>
    %4 = vector.broadcast %3 : vector<1x96xf32> to vector<16x96xf32>
    %5 = arith.addf %2, %4 : vector<16x96xf32>
    %6 = vector.extract_strided_slice %5 {offsets = [0, 0], sizes = [16, 32], strides = [1, 1]} : vector<16x96xf32> to vector<16x32xf32>
    %7 = vector.extract_strided_slice %5 {offsets = [0, 32], sizes = [16, 32], strides = [1, 1]} : vector<16x96xf32> to vector<16x32xf32>
    %8 = vector.extract_strided_slice %5 {offsets = [0, 64], sizes = [16, 32], strides = [1, 1]} : vector<16x96xf32> to vector<16x32xf32>
    %9 = vector.extract_strided_slice %6 {offsets = [0, 0], sizes = [16, 8], strides = [1, 1]} : vector<16x32xf32> to vector<16x8xf32>
    %10 = vector.shape_cast %9 : vector<16x8xf32> to vector<2x8x8xf32>
    %11 = vector.extract_strided_slice %7 {offsets = [0, 0], sizes = [16, 8], strides = [1, 1]} : vector<16x32xf32> to vector<16x8xf32>
    %12 = vector.shape_cast %11 : vector<16x8xf32> to vector<2x8x8xf32>
    %13 = vector.extract_strided_slice %8 {offsets = [0, 0], sizes = [16, 8], strides = [1, 1]} : vector<16x32xf32> to vector<16x8xf32>
    %14 = vector.shape_cast %13 : vector<16x8xf32> to vector<2x8x8xf32>
    "tpu.trace_start"() <{level = 10 : i32, message = "bnd,bmd->bnm"}> : () -> ()
    %cst_5 = arith.constant dense<0.000000e+00> : vector<2x8x8xf32>
    %15 = tpu.matmul %10, %12, %cst_5 {dimension_numbers = #tpu.dot_dimension_numbers<[2], [2], [1], [1], [0, 0, 0, 1, 1, 1], [0], [0]>} : vector<2x8x8xf32>, vector<2x8x8xf32>, vector<2x8x8xf32> -> vector<2x8x8xf32>
    "tpu.trace_stop"() : () -> ()
    %cst_6 = arith.constant 0.353553385 : f32
    %16 = vector.broadcast %cst_6 : f32 to vector<2x8x8xf32>
    %17 = arith.mulf %15, %16 : vector<2x8x8xf32>
    %cst_7 = arith.constant dense<0xFF800000> : vector<2x8xf32>
    %18 = vector.multi_reduction <maximumf>, %17, %cst_7 [2] : vector<2x8x8xf32> to vector<2x8xf32>
    %19 = vector.shape_cast %18 : vector<2x8xf32> to vector<2x8x1xf32>
    %20 = vector.broadcast %19 : vector<2x8x1xf32> to vector<2x8x8xf32>
    %21 = arith.subf %17, %20 : vector<2x8x8xf32>
    %22 = math.exp %21 : vector<2x8x8xf32>
    %cst_8 = arith.constant dense<0.000000e+00> : vector<2x8xf32>
    %23 = vector.multi_reduction <add>, %22, %cst_8 [2] : vector<2x8x8xf32> to vector<2x8xf32>
    %24 = vector.shape_cast %23 : vector<2x8xf32> to vector<2x8x1xf32>
    %25 = tpu.reciprocal %24 {approx = true} : vector<2x8x1xf32> -> vector<2x8x1xf32>
    %26 = vector.broadcast %25 : vector<2x8x1xf32> to vector<2x8x8xf32>
    %27 = arith.mulf %22, %26 : vector<2x8x8xf32>
    "tpu.trace_start"() <{level = 10 : i32, message = "bnm,bmd->bnd"}> : () -> ()
    %cst_9 = arith.constant dense<0.000000e+00> : vector<2x8x8xf32>
    %28 = tpu.matmul %27, %14, %cst_9 {dimension_numbers = #tpu.dot_dimension_numbers<[2], [1], [1], [2], [0, 0, 0, 1, 1, 2], [0], [0]>} : vector<2x8x8xf32>, vector<2x8x8xf32>, vector<2x8x8xf32> -> vector<2x8x8xf32>
    "tpu.trace_stop"() : () -> ()
    %29 = vector.shape_cast %28 : vector<2x8x8xf32> to vector<16x8xf32>
    %30 = vector.extract_strided_slice %6 {offsets = [0, 8], sizes = [16, 8], strides = [1, 1]} : vector<16x32xf32> to vector<16x8xf32>
    %31 = vector.shape_cast %30 : vector<16x8xf32> to vector<2x8x8xf32>
    %32 = vector.extract_strided_slice %7 {offsets = [0, 8], sizes = [16, 8], strides = [1, 1]} : vector<16x32xf32> to vector<16x8xf32>
    %33 = vector.shape_cast %32 : vector<16x8xf32> to vector<2x8x8xf32>
    %34 = vector.extract_strided_slice %8 {offsets = [0, 8], sizes = [16, 8], strides = [1, 1]} : vector<16x32xf32> to vector<16x8xf32>
    %35 = vector.shape_cast %34 : vector<16x8xf32> to vector<2x8x8xf32>
    "tpu.trace_start"() <{level = 10 : i32, message = "bnd,bmd->bnm"}> : () -> ()
    %cst_10 = arith.constant dense<0.000000e+00> : vector<2x8x8xf32>
    %36 = tpu.matmul %31, %33, %cst_10 {dimension_numbers = #tpu.dot_dimension_numbers<[2], [2], [1], [1], [0, 0, 0, 1, 1, 1], [0], [0]>} : vector<2x8x8xf32>, vector<2x8x8xf32>, vector<2x8x8xf32> -> vector<2x8x8xf32>
    "tpu.trace_stop"() : () -> ()
    %cst_11 = arith.constant 0.353553385 : f32
    %37 = vector.broadcast %cst_11 : f32 to vector<2x8x8xf32>
    %38 = arith.mulf %36, %37 : vector<2x8x8xf32>
    %cst_12 = arith.constant dense<0xFF800000> : vector<2x8xf32>
    %39 = vector.multi_reduction <maximumf>, %38, %cst_12 [2] : vector<2x8x8xf32> to vector<2x8xf32>
    %40 = vector.shape_cast %39 : vector<2x8xf32> to vector<2x8x1xf32>
    %41 = vector.broadcast %40 : vector<2x8x1xf32> to vector<2x8x8xf32>
    %42 = arith.subf %38, %41 : vector<2x8x8xf32>
    %43 = math.exp %42 : vector<2x8x8xf32>
    %cst_13 = arith.constant dense<0.000000e+00> : vector<2x8xf32>
    %44 = vector.multi_reduction <add>, %43, %cst_13 [2] : vector<2x8x8xf32> to vector<2x8xf32>
    %45 = vector.shape_cast %44 : vector<2x8xf32> to vector<2x8x1xf32>
    %46 = tpu.reciprocal %45 {approx = true} : vector<2x8x1xf32> -> vector<2x8x1xf32>
    %47 = vector.broadcast %46 : vector<2x8x1xf32> to vector<2x8x8xf32>
    %48 = arith.mulf %43, %47 : vector<2x8x8xf32>
    "tpu.trace_start"() <{level = 10 : i32, message = "bnm,bmd->bnd"}> : () -> ()
    %cst_14 = arith.constant dense<0.000000e+00> : vector<2x8x8xf32>
    %49 = tpu.matmul %48, %35, %cst_14 {dimension_numbers = #tpu.dot_dimension_numbers<[2], [1], [1], [2], [0, 0, 0, 1, 1, 2], [0], [0]>} : vector<2x8x8xf32>, vector<2x8x8xf32>, vector<2x8x8xf32> -> vector<2x8x8xf32>
    "tpu.trace_stop"() : () -> ()
    %50 = vector.shape_cast %49 : vector<2x8x8xf32> to vector<16x8xf32>
    %51 = vector.extract_strided_slice %6 {offsets = [0, 16], sizes = [16, 8], strides = [1, 1]} : vector<16x32xf32> to vector<16x8xf32>
    %52 = vector.shape_cast %51 : vector<16x8xf32> to vector<2x8x8xf32>
    %53 = vector.extract_strided_slice %7 {offsets = [0, 16], sizes = [16, 8], strides = [1, 1]} : vector<16x32xf32> to vector<16x8xf32>
    %54 = vector.shape_cast %53 : vector<16x8xf32> to vector<2x8x8xf32>
    %55 = vector.extract_strided_slice %8 {offsets = [0, 16], sizes = [16, 8], strides = [1, 1]} : vector<16x32xf32> to vector<16x8xf32>
    %56 = vector.shape_cast %55 : vector<16x8xf32> to vector<2x8x8xf32>
    "tpu.trace_start"() <{level = 10 : i32, message = "bnd,bmd->bnm"}> : () -> ()
    %cst_15 = arith.constant dense<0.000000e+00> : vector<2x8x8xf32>
    %57 = tpu.matmul %52, %54, %cst_15 {dimension_numbers = #tpu.dot_dimension_numbers<[2], [2], [1], [1], [0, 0, 0, 1, 1, 1], [0], [0]>} : vector<2x8x8xf32>, vector<2x8x8xf32>, vector<2x8x8xf32> -> vector<2x8x8xf32>
    "tpu.trace_stop"() : () -> ()
    %cst_16 = arith.constant 0.353553385 : f32
    %58 = vector.broadcast %cst_16 : f32 to vector<2x8x8xf32>
    %59 = arith.mulf %57, %58 : vector<2x8x8xf32>
    %cst_17 = arith.constant dense<0xFF800000> : vector<2x8xf32>
    %60 = vector.multi_reduction <maximumf>, %59, %cst_17 [2] : vector<2x8x8xf32> to vector<2x8xf32>
    %61 = vector.shape_cast %60 : vector<2x8xf32> to vector<2x8x1xf32>
    %62 = vector.broadcast %61 : vector<2x8x1xf32> to vector<2x8x8xf32>
    %63 = arith.subf %59, %62 : vector<2x8x8xf32>
    %64 = math.exp %63 : vector<2x8x8xf32>
    %cst_18 = arith.constant dense<0.000000e+00> : vector<2x8xf32>
    %65 = vector.multi_reduction <add>, %64, %cst_18 [2] : vector<2x8x8xf32> to vector<2x8xf32>
    %66 = vector.shape_cast %65 : vector<2x8xf32> to vector<2x8x1xf32>
    %67 = tpu.reciprocal %66 {approx = true} : vector<2x8x1xf32> -> vector<2x8x1xf32>
    %68 = vector.broadcast %67 : vector<2x8x1xf32> to vector<2x8x8xf32>
    %69 = arith.mulf %64, %68 : vector<2x8x8xf32>
    "tpu.trace_start"() <{level = 10 : i32, message = "bnm,bmd->bnd"}> : () -> ()
    %cst_19 = arith.constant dense<0.000000e+00> : vector<2x8x8xf32>
    %70 = tpu.matmul %69, %56, %cst_19 {dimension_numbers = #tpu.dot_dimension_numbers<[2], [1], [1], [2], [0, 0, 0, 1, 1, 2], [0], [0]>} : vector<2x8x8xf32>, vector<2x8x8xf32>, vector<2x8x8xf32> -> vector<2x8x8xf32>
    "tpu.trace_stop"() : () -> ()
    %71 = vector.shape_cast %70 : vector<2x8x8xf32> to vector<16x8xf32>
    %72 = vector.extract_strided_slice %6 {offsets = [0, 24], sizes = [16, 8], strides = [1, 1]} : vector<16x32xf32> to vector<16x8xf32>
    %73 = vector.shape_cast %72 : vector<16x8xf32> to vector<2x8x8xf32>
    %74 = vector.extract_strided_slice %7 {offsets = [0, 24], sizes = [16, 8], strides = [1, 1]} : vector<16x32xf32> to vector<16x8xf32>
    %75 = vector.shape_cast %74 : vector<16x8xf32> to vector<2x8x8xf32>
    %76 = vector.extract_strided_slice %8 {offsets = [0, 24], sizes = [16, 8], strides = [1, 1]} : vector<16x32xf32> to vector<16x8xf32>
    %77 = vector.shape_cast %76 : vector<16x8xf32> to vector<2x8x8xf32>
    "tpu.trace_start"() <{level = 10 : i32, message = "bnd,bmd->bnm"}> : () -> ()
    %cst_20 = arith.constant dense<0.000000e+00> : vector<2x8x8xf32>
    %78 = tpu.matmul %73, %75, %cst_20 {dimension_numbers = #tpu.dot_dimension_numbers<[2], [2], [1], [1], [0, 0, 0, 1, 1, 1], [0], [0]>} : vector<2x8x8xf32>, vector<2x8x8xf32>, vector<2x8x8xf32> -> vector<2x8x8xf32>
    "tpu.trace_stop"() : () -> ()
    %cst_21 = arith.constant 0.353553385 : f32
    %79 = vector.broadcast %cst_21 : f32 to vector<2x8x8xf32>
    %80 = arith.mulf %78, %79 : vector<2x8x8xf32>
    %cst_22 = arith.constant dense<0xFF800000> : vector<2x8xf32>
    %81 = vector.multi_reduction <maximumf>, %80, %cst_22 [2] : vector<2x8x8xf32> to vector<2x8xf32>
    %82 = vector.shape_cast %81 : vector<2x8xf32> to vector<2x8x1xf32>
    %83 = vector.broadcast %82 : vector<2x8x1xf32> to vector<2x8x8xf32>
    %84 = arith.subf %80, %83 : vector<2x8x8xf32>
    %85 = math.exp %84 : vector<2x8x8xf32>
    %cst_23 = arith.constant dense<0.000000e+00> : vector<2x8xf32>
    %86 = vector.multi_reduction <add>, %85, %cst_23 [2] : vector<2x8x8xf32> to vector<2x8xf32>
    %87 = vector.shape_cast %86 : vector<2x8xf32> to vector<2x8x1xf32>
    %88 = tpu.reciprocal %87 {approx = true} : vector<2x8x1xf32> -> vector<2x8x1xf32>
    %89 = vector.broadcast %88 : vector<2x8x1xf32> to vector<2x8x8xf32>
    %90 = arith.mulf %85, %89 : vector<2x8x8xf32>
    "tpu.trace_start"() <{level = 10 : i32, message = "bnm,bmd->bnd"}> : () -> ()
    %cst_24 = arith.constant dense<0.000000e+00> : vector<2x8x8xf32>
    %91 = tpu.matmul %90, %77, %cst_24 {dimension_numbers = #tpu.dot_dimension_numbers<[2], [1], [1], [2], [0, 0, 0, 1, 1, 2], [0], [0]>} : vector<2x8x8xf32>, vector<2x8x8xf32>, vector<2x8x8xf32> -> vector<2x8x8xf32>
    "tpu.trace_stop"() : () -> ()
    %92 = vector.shape_cast %91 : vector<2x8x8xf32> to vector<16x8xf32>
    %93 = tpu.concatenate %29, %50, %71, %92 in 1 : vector<16x8xf32>, vector<16x8xf32>, vector<16x8xf32>, vector<16x8xf32> -> vector<16x32xf32>
    %c0_25 = arith.constant 0 : index
    %c96 = arith.constant 96 : index
    %94 = vector.load %arg1[%c0_25, %c96] : memref<32x192xf32, #tpu.memory_space<vmem>>, vector<32x32xf32>
    %cst_26 = arith.constant dense<0.000000e+00> : vector<16x32xf32>
    %95 = tpu.matmul %93, %94, %cst_26 {dimension_numbers = #tpu.dot_dimension_numbers<[1], [0], [0], [1], [0, 0, 1, 1], [], []>} : vector<16x32xf32>, vector<32x32xf32>, vector<16x32xf32> -> vector<16x32xf32>
    %c1 = arith.constant 1 : index
    %c0_27 = arith.constant 0 : index
    %96 = vector.load %arg2[%c1, %c0_27] : memref<2x96xf32, #tpu.memory_space<vmem>>, vector<1x32xf32>
    %97 = vector.broadcast %96 : vector<1x32xf32> to vector<16x32xf32>
    %98 = arith.addf %95, %97 : vector<16x32xf32>
    %99 = arith.addf %98, %0 : vector<16x32xf32>
    %c0_28 = arith.constant 0 : index
    %c0_29 = arith.constant 0 : index
    %100 = vector.load %arg3[%c0_28, %c0_29] : memref<4x32xf32, #tpu.memory_space<vmem>>, vector<1x32xf32>
    %101 = vector.broadcast %100 : vector<1x32xf32> to vector<16x32xf32>
    %102 = arith.mulf %99, %101 : vector<16x32xf32>
    %c1_30 = arith.constant 1 : index
    %c0_31 = arith.constant 0 : index
    %103 = vector.load %arg3[%c1_30, %c0_31] : memref<4x32xf32, #tpu.memory_space<vmem>>, vector<1x32xf32>
    %104 = vector.broadcast %103 : vector<1x32xf32> to vector<16x32xf32>
    %105 = arith.addf %102, %104 : vector<16x32xf32>
    %c0_32 = arith.constant 0 : index
    %c128 = arith.constant 128 : index
    %106 = vector.load %arg1[%c0_32, %c128] : memref<32x192xf32, #tpu.memory_space<vmem>>, vector<32x32xf32>
    %cst_33 = arith.constant dense<0.000000e+00> : vector<16x32xf32>
    %107 = tpu.matmul %105, %106, %cst_33 {dimension_numbers = #tpu.dot_dimension_numbers<[1], [0], [0], [1], [0, 0, 1, 1], [], []>} : vector<16x32xf32>, vector<32x32xf32>, vector<16x32xf32> -> vector<16x32xf32>
    %c1_34 = arith.constant 1 : index
    %c32 = arith.constant 32 : index
    %108 = vector.load %arg2[%c1_34, %c32] : memref<2x96xf32, #tpu.memory_space<vmem>>, vector<1x32xf32>
    %109 = vector.broadcast %108 : vector<1x32xf32> to vector<16x32xf32>
    %110 = arith.addf %107, %109 : vector<16x32xf32>
    %cst_35 = arith.constant 0.000000e+00 : f32
    %111 = vector.broadcast %cst_35 : f32 to vector<16x32xf32>
    %112 = arith.maximumf %110, %111 : vector<16x32xf32>
    %c0_36 = arith.constant 0 : index
    %c160 = arith.constant 160 : index
    %113 = vector.load %arg1[%c0_36, %c160] : memref<32x192xf32, #tpu.memory_space<vmem>>, vector<32x32xf32>
    %cst_37 = arith.constant dense<0.000000e+00> : vector<16x32xf32>
    %114 = tpu.matmul %112, %113, %cst_37 {dimension_numbers = #tpu.dot_dimension_numbers<[1], [0], [0], [1], [0, 0, 1, 1], [], []>} : vector<16x32xf32>, vector<32x32xf32>, vector<16x32xf32> -> vector<16x32xf32>
    %c1_38 = arith.constant 1 : index
    %c64 = arith.constant 64 : index
    %115 = vector.load %arg2[%c1_38, %c64] : memref<2x96xf32, #tpu.memory_space<vmem>>, vector<1x32xf32>
    %116 = vector.broadcast %115 : vector<1x32xf32> to vector<16x32xf32>
    %117 = arith.addf %114, %116 : vector<16x32xf32>
    %118 = arith.addf %117, %105 : vector<16x32xf32>
    %c2 = arith.constant 2 : index
    %c0_39 = arith.constant 0 : index
    %119 = vector.load %arg3[%c2, %c0_39] : memref<4x32xf32, #tpu.memory_space<vmem>>, vector<1x32xf32>
    %120 = vector.broadcast %119 : vector<1x32xf32> to vector<16x32xf32>
    %121 = arith.mulf %118, %120 : vector<16x32xf32>
    %c3 = arith.constant 3 : index
    %c0_40 = arith.constant 0 : index
    %122 = vector.load %arg3[%c3, %c0_40] : memref<4x32xf32, #tpu.memory_space<vmem>>, vector<1x32xf32>
    %123 = vector.broadcast %122 : vector<1x32xf32> to vector<16x32xf32>
    %124 = arith.addf %121, %123 : vector<16x32xf32>
    %c0_41 = arith.constant 0 : index
    %c0_42 = arith.constant 0 : index
    %125 = vector.load %arg4[%c0_41, %c0_42] : memref<16x32xf32, #tpu.memory_space<vmem>>, vector<16x32xf32>
    tpu.vector_store %arg4[%c0_41, %c0_42], %124 {strides = array<i32>} : memref<16x32xf32, #tpu.memory_space<vmem>>, vector<16x32xf32>,
    return
  }
}

</mosaic_0001>

<llo_original>
// kernel: gat_layer_pallas.1
$region0: #{gat_layer_pallas.1}
  #allocation0 [shape = 'u32[]', space=smem, size = 0x4, offset = 0x4, fixed_abs, tag = 'smem constant byte address 0x4 - core index']
  #allocation1 [shape = 'u32[144,128]{1,0:T(1,128)}', space=vmem, size = 0x12000, scoped, tag = 'internal scratch']
  %s0 = inlined_call_operand.vmem [shape: f32[16,32], index: 0, kind: input, shape index: {}]
  %s1 = inlined_call_operand.vmem [shape: f32[32,192], index: 1, kind: input, shape index: {}]
  %s2 = inlined_call_operand.vmem [shape: f32[2,96], index: 2, kind: input, shape index: {}]
  %s3 = inlined_call_operand.vmem [shape: f32[4,32], index: 3, kind: input, shape index: {}]
  %s4 = inlined_call_operand.hbm [shape: f32[16,32], index: 4, kind: output, shape index: {}]
  %s5 = sld [smem:[#allocation0]]
  $region26: #{gat_layer_pallas.1} parent=0
    _
  %s7 = ssub.s32 1, %s5
  %s8 = scalar_select 0, %s7, %s5
  $region1: #{gat_layer_pallas.1} parent=0
    #allocation2 [shape = 'u8[8192]{0}', space=vmem, size = 0x2000, scoped, tag = 'output window, operand 0, single buffered']
    #allocation3 [shape = 's32[1]{0}', space=sflag, size = 0x4, scoped, tag = 'scoped memory for gat_layer_pallas.1']
    %9 = vsyncpa [#allocation3], 0
    // Predicated region
    $region2: #{gat_layer_pallas.1} parent=1 // pred_check
      _
    $region3: #{gat_layer_pallas.1} parent=1 // pred_check_branch
      %11 = sbr.rel (0) target = $region5
    $region4: #{gat_layer_pallas.1} parent=1 // pred_region
      _
    $region5: #{gat_layer_pallas.1} parent=1 // pred_fallthru
      _
    // Predicated region
    $region6: #{gat_layer_pallas.1} parent=1 // pred_check
      _
    $region7: #{gat_layer_pallas.1} parent=1 // pred_check_branch
      %13 = sbr.rel (0) target = $region9
    $region8: #{gat_layer_pallas.1} parent=1 // pred_region
      _
    $region9: #{gat_layer_pallas.1} parent=1 // pred_fallthru
      _
    // Predicated region
    $region10: #{gat_layer_pallas.1} parent=1 // pred_check
      _
    $region11: #{gat_layer_pallas.1} parent=1 // pred_check_branch
      %15 = sbr.rel (0) target = $region13
    $region12: #{gat_layer_pallas.1} parent=1 // pred_region
      _
    $region13: #{gat_layer_pallas.1} parent=1 // pred_fallthru
      _
    // Predicated region
    $region14: #{gat_layer_pallas.1} parent=1 // pred_check
      _
    $region15: #{gat_layer_pallas.1} parent=1 // pred_check_branch
      %17 = sbr.rel (0) target = $region17
    $region16: #{gat_layer_pallas.1} parent=1 // pred_region
      _
    $region17: #{gat_layer_pallas.1} parent=1 // pred_fallthru
      _
    %v18 = vld [vmem:[%s0] sm:$0xff]
    %v19 = vld [vmem:[%s0 + $0x8] sm:$0xff]
    %v20 = vld [vmem:[%s1] sm:$0xff]
    %v21 = vld [vmem:[%s1 + $0x10] sm:$0xff]
    %v22 = vld [vmem:[%s1 + $0x20] sm:$0xff]
    %v23 = vld [vmem:[%s1 + $0x30] sm:$0xff]
    %v24 = vld [vmem:[%s2] sm:$0x1]
    %v25 = vlaneseq
    %v26 = vshrl.u32 %v25, 7
    %v27 = vsub.s32 0, %v26
    %v28 = vrot.slane %v24, %v27
    %vm29 = vcmask 261120
    %v31 = vsel %vm29, %v18, 0
    %v34 = vsel %vm29, %v19, 0
    %36 = vmatprep.subr.mxu0 0.0
    %37 = vmatpush1.msra.mxu0 %v20
    %38 = vmatprep.subr.mxu0 0.0
    %39 = vmatpush1.msra.mxu0 %v21
    %40 = vmatprep.subr.mxu0 0.0
    %41 = vmatpush1.msra.mxu0 %v22
    %42 = vmatprep.subr.mxu0 0.0
    %43 = vmatpush1.msra.mxu0 %v23
    %44 = vmatprep.subr.mxu0 0.0
    %45 = vmatpush1.msra.mxu0 0.0
    %46 = vmatprep.subr.mxu0 0.0
    %47 = vmatpush1.msra.mxu0 0.0
    %48 = vmatprep.subr.mxu0 0.0
    %49 = vmatpush1.msra.mxu0 0.0
    %50 = vmatprep.subr.mxu0 0.0
    %51 = vmatpush1.msra.mxu0 0.0
    %52 = vmatprep.subr.mxu0 0.0
    %53 = vmatpush1.msra.mxu0 0.0
    %54 = vmatprep.subr.mxu0 0.0
    %55 = vmatpush1.msra.mxu0 0.0
    %56 = vmatprep.subr.mxu0 0.0
    %57 = vmatpush1.msra.mxu0 0.0
    %58 = vmatprep.subr.mxu0 0.0
    %59 = vmatpush1.msra.mxu0 0.0
    %60 = vmatprep.subr.mxu0 0.0
    %61 = vmatpush1.msra.mxu0 0.0
    %62 = vmatprep.subr.mxu0 0.0
    %63 = vmatpush1.msra.mxu0 0.0
    %64 = vmatprep.subr.mxu0 0.0
    %65 = vmatpush1.msra.mxu0 0.0
    %66 = vmatprep.subr.mxu0 0.0
    %67 = vmatpush1.msra.mxu0 0.0
    %68 = vmatprep.subr.mxu0 0.0
    %69 = vmatpush1.msra.mxu0 0.0
    %70 = vmatprep.subr.mxu0 0.0
    %71 = vmatpush1.msra.mxu0 0.0
    %72 = vmatprep.subr.mxu0 0.0
    %73 = vmatpush1.msra.mxu0 0.0
    %74 = vmatprep.subr.mxu0 0.0
    %75 = vmatpush1.msra.mxu0 0.0
    %76 = vmatprep.subr.mxu0 0.0
    %77 = vmatpush1.msra.mxu0 0.0
    %78 = vmatprep.subr.mxu0 0.0
    %79 = vmatpush1.msra.mxu0 0.0
    %80 = vmatprep.subr.mxu0 0.0
    %81 = vmatpush1.msra.mxu0 0.0
    %82 = vmatprep.subr.mxu0 0.0
    %83 = vmatpush1.msra.mxu0 0.0
    %84 = vmatprep.subr.mxu0 0.0
    %85 = vmatpush1.msra.mxu0 0.0
    %86 = vmatprep.subr.mxu0 0.0
    %87 = vmatpush1.msra.mxu0 0.0
    %88 = vmatprep.subr.mxu0 0.0
    %89 = vmatpush1.msra.mxu0 0.0
    %90 = vmatprep.subr.mxu0 0.0
    %91 = vmatpush1.msra.mxu0 0.0
    %92 = vmatprep.subr.mxu0 0.0
    %93 = vmatpush1.msra.mxu0 0.0
    %94 = vmatprep.subr.mxu0 0.0
    %95 = vmatpush1.msra.mxu0 0.0
    %96 = vmatprep.subr.mxu0 0.0
    %97 = vmatpush1.msra.mxu0 0.0
    %98 = vmatprep.subr.mxu0 0.0
    %99 = vmatpush1.msra.mxu0 0.0
    %100 = vmatprep.mubr.f32.mxu0 0.0
    %101 = vmatmul.mubr.f32.gmra.mrb[0].mxu0 %v31
    %v102 = vpop.f32.mrb[0].mxu0
    %v103 = vadd.f32 %v28, %v102
    %v104 = vpop.f32.mrb[0].mxu0
    %105 = vmatprep.mubr.f32.mxu0 0.0
    %106 = vmatmul.mubr.f32.gmra.mrb[0].mxu0 %v34
    %v107 = vpop.f32.mrb[0].mxu0
    %v108 = vadd.f32 %v28, %v107
    %v109 = vpop.f32.mrb[0].mxu0
    %110 = vdwg.mxu0
    %112 = vrot.lane.b32.xlu0 %v103, 96
    %v113 = vpop.permute.xlu0 %112
    %vm114 = vcmask 64512
    %v115 = vsel %vm114, %v103, 0
    %v117 = vsel %vm114, %v113, 0
    %119 = vmatprep.subr.mxu0 0.0
    %120 = vmatpush1.xpose.msra.mxu0 %v117
    %121 = vmatprep.subr.mxu0 0.0
    %122 = vmatpush1.xpose.msra.mxu0 0.0
    %123 = vmatprep.subr.mxu0 0.0
    %124 = vmatpush1.xpose.msra.mxu0 0.0
    %125 = vmatprep.subr.mxu0 0.0
    %126 = vmatpush1.xpose.msra.mxu0 0.0
    %127 = vmatprep.subr.mxu0 0.0
    %128 = vmatpush1.xpose.msra.mxu0 0.0
    %129 = vmatprep.subr.mxu0 0.0
    %130 = vmatpush1.xpose.msra.mxu0 0.0
    %131 = vmatprep.subr.mxu0 0.0
    %132 = vmatpush1.xpose.msra.mxu0 0.0
    %133 = vmatprep.subr.mxu0 0.0
    %134 = vmatpush1.xpose.msra.mxu0 0.0
    %135 = vmatprep.subr.mxu0 0.0
    %136 = vmatpush1.xpose.msra.mxu0 0.0
    %137 = vmatprep.subr.mxu0 0.0
    %138 = vmatpush1.xpose.msra.mxu0 0.0
    %139 = vmatprep.subr.mxu0 0.0
    %140 = vmatpush1.xpose.msra.mxu0 0.0
    %141 = vmatprep.subr.mxu0 0.0
    %142 = vmatpush1.xpose.msra.mxu0 0.0
    %143 = vmatprep.subr.mxu0 0.0
    %144 = vmatpush1.xpose.msra.mxu0 0.0
    %145 = vmatprep.subr.mxu0 0.0
    %146 = vmatpush1.xpose.msra.mxu0 0.0
    %147 = vmatprep.subr.mxu0 0.0
    %148 = vmatpush1.xpose.msra.mxu0 0.0
    %149 = vmatprep.subr.mxu0 0.0
    %150 = vmatpush1.xpose.msra.mxu0 0.0
    %151 = vmatprep.subr.mxu0 0.0
    %152 = vmatpush1.xpose.msra.mxu0 0.0
    %153 = vmatprep.subr.mxu0 0.0
    %154 = vmatpush1.xpose.msra.mxu0 0.0
    %155 = vmatprep.subr.mxu0 0.0
    %156 = vmatpush1.xpose.msra.mxu0 0.0
    %157 = vmatprep.subr.mxu0 0.0
    %158 = vmatpush1.xpose.msra.mxu0 0.0
    %159 = vmatprep.subr.mxu0 0.0
    %160 = vmatpush1.xpose.msra.mxu0 0.0
    %161 = vmatprep.subr.mxu0 0.0
    %162 = vmatpush1.xpose.msra.mxu0 0.0
    %163 = vmatprep.subr.mxu0 0.0
    %164 = vmatpush1.xpose.msra.mxu0 0.0
    %165 = vmatprep.subr.mxu0 0.0
    %166 = vmatpush1.xpose.msra.mxu0 0.0
    %167 = vmatprep.subr.mxu0 0.0
    %168 = vmatpush1.xpose.msra.mxu0 0.0
    %169 = vmatprep.subr.mxu0 0.0
    %170 = vmatpush1.xpose.msra.mxu0 0.0
    %171 = vmatprep.subr.mxu0 0.0
    %172 = vmatpush1.xpose.msra.mxu0 0.0
    %173 = vmatprep.subr.mxu0 0.0
    %174 = vmatpush1.xpose.msra.mxu0 0.0
    %175 = vmatprep.subr.mxu0 0.0
    %176 = vmatpush1.xpose.msra.mxu0 0.0
    %177 = vmatprep.subr.mxu0 0.0
    %178 = vmatpush1.xpose.msra.mxu0 0.0
    %179 = vmatprep.subr.mxu0 0.0
    %180 = vmatpush1.xpose.msra.mxu0 0.0
    %181 = vmatprep.subr.mxu0 0.0
    %182 = vmatpush1.xpose.msra.mxu0 0.0
    %183 = vmatprep.mubr.f32.mxu0 0.0
    %184 = vmatmul.mubr.f32.gmra.mrb[0].mxu0 %v115
    %v185 = vpop.f32.mrb[0].mxu0
    %v186 = vadd.f32 0.0, %v185
    %v187 = vpop.f32.mrb[0].mxu0
    %188 = vdwg.mxu0
    %190 = vrot.lane.b32.xlu0 %v108, 96
    %v191 = vpop.permute.xlu0 %190
    %v192 = vsel %vm114, %v108, 0
    %v194 = vsel %vm114, %v191, 0
    %196 = vmatprep.subr.mxu0 0.0
    %197 = vmatpush1.xpose.msra.mxu0 %v194
    %198 = vmatprep.subr.mxu0 0.0
    %199 = vmatpush1.xpose.msra.mxu0 0.0
    %200 = vmatprep.subr.mxu0 0.0
    %201 = vmatpush1.xpose.msra.mxu0 0.0
    %202 = vmatprep.subr.mxu0 0.0
    %203 = vmatpush1.xpose.msra.mxu0 0.0
    %204 = vmatprep.subr.mxu0 0.0
    %205 = vmatpush1.xpose.msra.mxu0 0.0
    %206 = vmatprep.subr.mxu0 0.0
    %207 = vmatpush1.xpose.msra.mxu0 0.0
    %208 = vmatprep.subr.mxu0 0.0
    %209 = vmatpush1.xpose.msra.mxu0 0.0
    %210 = vmatprep.subr.mxu0 0.0
    %211 = vmatpush1.xpose.msra.mxu0 0.0
    %212 = vmatprep.subr.mxu0 0.0
    %213 = vmatpush1.xpose.msra.mxu0 0.0
    %214 = vmatprep.subr.mxu0 0.0
    %215 = vmatpush1.xpose.msra.mxu0 0.0
    %216 = vmatprep.subr.mxu0 0.0
    %217 = vmatpush1.xpose.msra.mxu0 0.0
    %218 = vmatprep.subr.mxu0 0.0
    %219 = vmatpush1.xpose.msra.mxu0 0.0
    %220 = vmatprep.subr.mxu0 0.0
    %221 = vmatpush1.xpose.msra.mxu0 0.0
    %222 = vmatprep.subr.mxu0 0.0
    %223 = vmatpush1.xpose.msra.mxu0 0.0
    %224 = vmatprep.subr.mxu0 0.0
    %225 = vmatpush1.xpose.msra.mxu0 0.0
    %226 = vmatprep.subr.mxu0 0.0
    %227 = vmatpush1.xpose.msra.mxu0 0.0
    %228 = vmatprep.subr.mxu0 0.0
    %229 = vmatpush1.xpose.msra.mxu0 0.0
    %230 = vmatprep.subr.mxu0 0.0
    %231 = vmatpush1.xpose.msra.mxu0 0.0
    %232 = vmatprep.subr.mxu0 0.0
    %233 = vmatpush1.xpose.msra.mxu0 0.0
    %234 = vmatprep.subr.mxu0 0.0
    %235 = vmatpush1.xpose.msra.mxu0 0.0
    %236 = vmatprep.subr.mxu0 0.0
    %237 = vmatpush1.xpose.msra.mxu0 0.0
    %238 = vmatprep.subr.mxu0 0.0
    %239 = vmatpush1.xpose.msra.mxu0 0.0
    %240 = vmatprep.subr.mxu0 0.0
    %241 = vmatpush1.xpose.msra.mxu0 0.0
    %242 = vmatprep.subr.mxu0 0.0
    %243 = vmatpush1.xpose.msra.mxu0 0.0
    %244 = vmatprep.subr.mxu0 0.0
    %245 = vmatpush1.xpose.msra.mxu0 0.0
    %246 = vmatprep.subr.mxu0 0.0
    %247 = vmatpush1.xpose.msra.mxu0 0.0
    %248 = vmatprep.subr.mxu0 0.0
    %249 = vmatpush1.xpose.msra.mxu0 0.0
    %250 = vmatprep.subr.mxu0 0.0
    %251 = vmatpush1.xpose.msra.mxu0 0.0
    %252 = vmatprep.subr.mxu0 0.0
    %253 = vmatpush1.xpose.msra.mxu0 0.0
    %254 = vmatprep.subr.mxu0 0.0
    %255 = vmatpush1.xpose.msra.mxu0 0.0
    %256 = vmatprep.subr.mxu0 0.0
    %257 = vmatpush1.xpose.msra.mxu0 0.0
    %258 = vmatprep.subr.mxu0 0.0
    %259 = vmatpush1.xpose.msra.mxu0 0.0
    %260 = vmatprep.mubr.f32.mxu0 0.0
    %261 = vmatmul.mubr.f32.gmra.mrb[0].mxu0 %v192
    %v262 = vpop.f32.mrb[0].mxu0
    %v263 = vadd.f32 0.0, %v262
    %v264 = vpop.f32.mrb[0].mxu0
    %265 = vdwg.mxu0
    %v266 = vmul.f32 %v186, 0.35355338
    %v267 = vmul.f32 %v263, 0.35355338
    %v268 = vsel %vm114, %v266, -inf
    %269 = vmax.xlane.f32.xlu0 %v268
    %v270 = vpop.xlane.xlu0 %269
    %v271 = vsel %vm114, %v267, -inf
    %272 = vmax.xlane.f32.xlu0 %v271
    %v273 = vpop.xlane.xlu0 %272
    %v274 = vsub.f32 %v266, %v270
    %v275 = vsub.f32 %v267, %v273
    %v276 = vmul.f32 %v274, 1.442695
    %v277 = vpow.pop %v276
    %v278 = vmul.f32 %v275, 1.442695
    %v279 = vpow.pop %v278
    %v280 = vsel %vm114, %v277, 0.0
    %281 = vadd.xlane.f32.xlu0 %v280
    %v282 = vpop.xlane.xlu0 %281
    %v283 = vsel %vm114, %v279, 0.0
    %284 = vadd.xlane.f32.xlu0 %v283
    %v285 = vpop.xlane.xlu0 %284
    %v286 = vrcp.pop %v282
    %v287 = vrcp.pop %v285
    %v288 = vmul.f32 %v277, %v286
    %v289 = vmul.f32 %v279, %v287
    %290 = vrot.lane.b32.xlu0 %v103, 64
    %v291 = vpop.permute.xlu0 %290
    %v294 = vsel %vm114, %v288, 0
    %296 = vmatprep.subr.mxu0 0.0
    %297 = vmatpush1.msra.mxu0 %v291
    %298 = vmatprep.subr.mxu0 0.0
    %299 = vmatpush1.msra.mxu0 0.0
    %300 = vmatprep.subr.mxu0 0.0
    %301 = vmatpush1.msra.mxu0 0.0
    %302 = vmatprep.subr.mxu0 0.0
    %303 = vmatpush1.msra.mxu0 0.0
    %304 = vmatprep.subr.mxu0 0.0
    %305 = vmatpush1.msra.mxu0 0.0
    %306 = vmatprep.subr.mxu0 0.0
    %307 = vmatpush1.msra.mxu0 0.0
    %308 = vmatprep.subr.mxu0 0.0
    %309 = vmatpush1.msra.mxu0 0.0
    %310 = vmatprep.subr.mxu0 0.0
    %311 = vmatpush1.msra.mxu0 0.0
    %312 = vmatprep.subr.mxu0 0.0
    %313 = vmatpush1.msra.mxu0 0.0
    %314 = vmatprep.subr.mxu0 0.0
    %315 = vmatpush1.msra.mxu0 0.0
    %316 = vmatprep.subr.mxu0 0.0
    %317 = vmatpush1.msra.mxu0 0.0
    %318 = vmatprep.subr.mxu0 0.0
    %319 = vmatpush1.msra.mxu0 0.0
    %320 = vmatprep.subr.mxu0 0.0
    %321 = vmatpush1.msra.mxu0 0.0
    %322 = vmatprep.subr.mxu0 0.0
    %323 = vmatpush1.msra.mxu0 0.0
    %324 = vmatprep.subr.mxu0 0.0
    %325 = vmatpush1.msra.mxu0 0.0
    %326 = vmatprep.subr.mxu0 0.0
    %327 = vmatpush1.msra.mxu0 0.0
    %328 = vmatprep.subr.mxu0 0.0
    %329 = vmatpush1.msra.mxu0 0.0
    %330 = vmatprep.subr.mxu0 0.0
    %331 = vmatpush1.msra.mxu0 0.0
    %332 = vmatprep.subr.mxu0 0.0
    %333 = vmatpush1.msra.mxu0 0.0
    %334 = vmatprep.subr.mxu0 0.0
    %335 = vmatpush1.msra.mxu0 0.0
    %336 = vmatprep.subr.mxu0 0.0
    %337 = vmatpush1.msra.mxu0 0.0
    %338 = vmatprep.subr.mxu0 0.0
    %339 = vmatpush1.msra.mxu0 0.0
    %340 = vmatprep.subr.mxu0 0.0
    %341 = vmatpush1.msra.mxu0 0.0
    %342 = vmatprep.subr.mxu0 0.0
    %343 = vmatpush1.msra.mxu0 0.0
    %344 = vmatprep.subr.mxu0 0.0
    %345 = vmatpush1.msra.mxu0 0.0
    %346 = vmatprep.subr.mxu0 0.0
    %347 = vmatpush1.msra.mxu0 0.0
    %348 = vmatprep.subr.mxu0 0.0
    %349 = vmatpush1.msra.mxu0 0.0
    %350 = vmatprep.subr.mxu0 0.0
    %351 = vmatpush1.msra.mxu0 0.0
    %352 = vmatprep.subr.mxu0 0.0
    %353 = vmatpush1.msra.mxu0 0.0
    %354 = vmatprep.subr.mxu0 0.0
    %355 = vmatpush1.msra.mxu0 0.0
    %356 = vmatprep.subr.mxu0 0.0
    %357 = vmatpush1.msra.mxu0 0.0
    %358 = vmatprep.subr.mxu0 0.0
    %359 = vmatpush1.msra.mxu0 0.0
    %360 = vmatprep.mubr.f32.mxu0 0.0
    %361 = vmatmul.mubr.f32.gmra.mrb[0].mxu0 %v294
    %v362 = vpop.f32.mrb[0].mxu0
    %v363 = vadd.f32 0.0, %v362
    %v364 = vpop.f32.mrb[0].mxu0
    %365 = vdwg.mxu0
    %366 = vrot.lane.b32.xlu0 %v108, 64
    %v367 = vpop.permute.xlu0 %366
    %v370 = vsel %vm114, %v289, 0
    %372 = vmatprep.subr.mxu0 0.0
    %373 = vmatpush1.msra.mxu0 %v367
    %374 = vmatprep.subr.mxu0 0.0
    %375 = vmatpush1.msra.mxu0 0.0
    %376 = vmatprep.subr.mxu0 0.0
    %377 = vmatpush1.msra.mxu0 0.0
    %378 = vmatprep.subr.mxu0 0.0
    %379 = vmatpush1.msra.mxu0 0.0
    %380 = vmatprep.subr.mxu0 0.0
    %381 = vmatpush1.msra.mxu0 0.0
    %382 = vmatprep.subr.mxu0 0.0
    %383 = vmatpush1.msra.mxu0 0.0
    %384 = vmatprep.subr.mxu0 0.0
    %385 = vmatpush1.msra.mxu0 0.0
    %386 = vmatprep.subr.mxu0 0.0
    %387 = vmatpush1.msra.mxu0 0.0
    %388 = vmatprep.subr.mxu0 0.0
    %389 = vmatpush1.msra.mxu0 0.0
    %390 = vmatprep.subr.mxu0 0.0
    %391 = vmatpush1.msra.mxu0 0.0
    %392 = vmatprep.subr.mxu0 0.0
    %393 = vmatpush1.msra.mxu0 0.0
    %394 = vmatprep.subr.mxu0 0.0
    %395 = vmatpush1.msra.mxu0 0.0
    %396 = vmatprep.subr.mxu0 0.0
    %397 = vmatpush1.msra.mxu0 0.0
    %398 = vmatprep.subr.mxu0 0.0
    %399 = vmatpush1.msra.mxu0 0.0
    %400 = vmatprep.subr.mxu0 0.0
    %401 = vmatpush1.msra.mxu0 0.0
    %402 = vmatprep.subr.mxu0 0.0
    %403 = vmatpush1.msra.mxu0 0.0
    %404 = vmatprep.subr.mxu0 0.0
    %405 = vmatpush1.msra.mxu0 0.0
    %406 = vmatprep.subr.mxu0 0.0
    %407 = vmatpush1.msra.mxu0 0.0
    %408 = vmatprep.subr.mxu0 0.0
    %409 = vmatpush1.msra.mxu0 0.0
    %410 = vmatprep.subr.mxu0 0.0
    %411 = vmatpush1.msra.mxu0 0.0
    %412 = vmatprep.subr.mxu0 0.0
    %413 = vmatpush1.msra.mxu0 0.0
    %414 = vmatprep.subr.mxu0 0.0
    %415 = vmatpush1.msra.mxu0 0.0
    %416 = vmatprep.subr.mxu0 0.0
    %417 = vmatpush1.msra.mxu0 0.0
    %418 = vmatprep.subr.mxu0 0.0
    %419 = vmatpush1.msra.mxu0 0.0
    %420 = vmatprep.subr.mxu0 0.0
    %421 = vmatpush1.msra.mxu0 0.0
    %422 = vmatprep.subr.mxu0 0.0
    %423 = vmatpush1.msra.mxu0 0.0
    %424 = vmatprep.subr.mxu0 0.0
    %425 = vmatpush1.msra.mxu0 0.0
    %426 = vmatprep.subr.mxu0 0.0
    %427 = vmatpush1.msra.mxu0 0.0
    %428 = vmatprep.subr.mxu0 0.0
    %429 = vmatpush1.msra.mxu0 0.0
    %430 = vmatprep.subr.mxu0 0.0
    %431 = vmatpush1.msra.mxu0 0.0
    %432 = vmatprep.subr.mxu0 0.0
    %433 = vmatpush1.msra.mxu0 0.0
    %434 = vmatprep.subr.mxu0 0.0
    %435 = vmatpush1.msra.mxu0 0.0
    %436 = vmatprep.mubr.f32.mxu0 0.0
    %437 = vmatmul.mubr.f32.gmra.mrb[0].mxu0 %v370
    %v438 = vpop.f32.mrb[0].mxu0
    %v439 = vadd.f32 0.0, %v438
    %v440 = vpop.f32.mrb[0].mxu0
    %441 = vdwg.mxu0
    %442 = vrot.lane.b32.xlu0 %v103, 120
    %v443 = vpop.permute.xlu0 %442
    %444 = vrot.lane.b32.xlu0 %v103, 88
    %v445 = vpop.permute.xlu0 %444
    %v446 = vsel %vm114, %v443, 0
    %v448 = vsel %vm114, %v445, 0
    %450 = vmatprep.subr.mxu0 0.0
    %451 = vmatpush1.xpose.msra.mxu0 %v448
    %452 = vmatprep.subr.mxu0 0.0
    %453 = vmatpush1.xpose.msra.mxu0 0.0
    %454 = vmatprep.subr.mxu0 0.0
    %455 = vmatpush1.xpose.msra.mxu0 0.0
    %456 = vmatprep.subr.mxu0 0.0
    %457 = vmatpush1.xpose.msra.mxu0 0.0
    %458 = vmatprep.subr.mxu0 0.0
    %459 = vmatpush1.xpose.msra.mxu0 0.0
    %460 = vmatprep.subr.mxu0 0.0
    %461 = vmatpush1.xpose.msra.mxu0 0.0
    %462 = vmatprep.subr.mxu0 0.0
    %463 = vmatpush1.xpose.msra.mxu0 0.0
    %464 = vmatprep.subr.mxu0 0.0
    %465 = vmatpush1.xpose.msra.mxu0 0.0
    %466 = vmatprep.subr.mxu0 0.0
    %467 = vmatpush1.xpose.msra.mxu0 0.0
    %468 = vmatprep.subr.mxu0 0.0
    %469 = vmatpush1.xpose.msra.mxu0 0.0
    %470 = vmatprep.subr.mxu0 0.0
    %471 = vmatpush1.xpose.msra.mxu0 0.0
    %472 = vmatprep.subr.mxu0 0.0
    %473 = vmatpush1.xpose.msra.mxu0 0.0
    %474 = vmatprep.subr.mxu0 0.0
    %475 = vmatpush1.xpose.msra.mxu0 0.0
    %476 = vmatprep.subr.mxu0 0.0
    %477 = vmatpush1.xpose.msra.mxu0 0.0
    %478 = vmatprep.subr.mxu0 0.0
    %479 = vmatpush1.xpose.msra.mxu0 0.0
    %480 = vmatprep.subr.mxu0 0.0
    %481 = vmatpush1.xpose.msra.mxu0 0.0
    %482 = vmatprep.subr.mxu0 0.0
    %483 = vmatpush1.xpose.msra.mxu0 0.0
    %484 = vmatprep.subr.mxu0 0.0
    %485 = vmatpush1.xpose.msra.mxu0 0.0
    %486 = vmatprep.subr.mxu0 0.0
    %487 = vmatpush1.xpose.msra.mxu0 0.0
    %488 = vmatprep.subr.mxu0 0.0
    %489 = vmatpush1.xpose.msra.mxu0 0.0
    %490 = vmatprep.subr.mxu0 0.0
    %491 = vmatpush1.xpose.msra.mxu0 0.0
    %492 = vmatprep.subr.mxu0 0.0
    %493 = vmatpush1.xpose.msra.mxu0 0.0
    %494 = vmatprep.subr.mxu0 0.0
    %495 = vmatpush1.xpose.msra.mxu0 0.0
    %496 = vmatprep.subr.mxu0 0.0
    %497 = vmatpush1.xpose.msra.mxu0 0.0
    %498 = vmatprep.subr.mxu0 0.0
    %499 = vmatpush1.xpose.msra.mxu0 0.0
    %500 = vmatprep.subr.mxu0 0.0
    %501 = vmatpush1.xpose.msra.mxu0 0.0
    %502 = vmatprep.subr.mxu0 0.0
    %503 = vmatpush1.xpose.msra.mxu0 0.0
    %504 = vmatprep.subr.mxu0 0.0
    %505 = vmatpush1.xpose.msra.mxu0 0.0
    %506 = vmatprep.subr.mxu0 0.0
    %507 = vmatpush1.xpose.msra.mxu0 0.0
    %508 = vmatprep.subr.mxu0 0.0
    %509 = vmatpush1.xpose.msra.mxu0 0.0
    %510 = vmatprep.subr.mxu0 0.0
    %511 = vmatpush1.xpose.msra.mxu0 0.0
    %512 = vmatprep.subr.mxu0 0.0
    %513 = vmatpush1.xpose.msra.mxu0 0.0
    %514 = vmatprep.mubr.f32.mxu0 0.0
    %515 = vmatmul.mubr.f32.gmra.mrb[0].mxu0 %v446
    %v516 = vpop.f32.mrb[0].mxu0
    %v517 = vadd.f32 0.0, %v516
    %v518 = vpop.f32.mrb[0].mxu0
    %519 = vdwg.mxu0
    %520 = vrot.lane.b32.xlu0 %v108, 120
    %v521 = vpop.permute.xlu0 %520
    %522 = vrot.lane.b32.xlu0 %v108, 88
    %v523 = vpop.permute.xlu0 %522
    %v524 = vsel %vm114, %v521, 0
    %v526 = vsel %vm114, %v523, 0
    %528 = vmatprep.subr.mxu0 0.0
    %529 = vmatpush1.xpose.msra.mxu0 %v526
    %530 = vmatprep.subr.mxu0 0.0
    %531 = vmatpush1.xpose.msra.mxu0 0.0
    %532 = vmatprep.subr.mxu0 0.0
    %533 = vmatpush1.xpose.msra.mxu0 0.0
    %534 = vmatprep.subr.mxu0 0.0
    %535 = vmatpush1.xpose.msra.mxu0 0.0
    %536 = vmatprep.subr.mxu0 0.0
    %537 = vmatpush1.xpose.msra.mxu0 0.0
    %538 = vmatprep.subr.mxu0 0.0
    %539 = vmatpush1.xpose.msra.mxu0 0.0
    %540 = vmatprep.subr.mxu0 0.0
    %541 = vmatpush1.xpose.msra.mxu0 0.0
    %542 = vmatprep.subr.mxu0 0.0
    %543 = vmatpush1.xpose.msra.mxu0 0.0
    %544 = vmatprep.subr.mxu0 0.0
    %545 = vmatpush1.xpose.msra.mxu0 0.0
    %546 = vmatprep.subr.mxu0 0.0
    %547 = vmatpush1.xpose.msra.mxu0 0.0
    %548 = vmatprep.subr.mxu0 0.0
    %549 = vmatpush1.xpose.msra.mxu0 0.0
    %550 = vmatprep.subr.mxu0 0.0
    %551 = vmatpush1.xpose.msra.mxu0 0.0
    %552 = vmatprep.subr.mxu0 0.0
    %553 = vmatpush1.xpose.msra.mxu0 0.0
    %554 = vmatprep.subr.mxu0 0.0
    %555 = vmatpush1.xpose.msra.mxu0 0.0
    %556 = vmatprep.subr.mxu0 0.0
    %557 = vmatpush1.xpose.msra.mxu0 0.0
    %558 = vmatprep.subr.mxu0 0.0
    %559 = vmatpush1.xpose.msra.mxu0 0.0
    %560 = vmatprep.subr.mxu0 0.0
    %561 = vmatpush1.xpose.msra.mxu0 0.0
    %562 = vmatprep.subr.mxu0 0.0
    %563 = vmatpush1.xpose.msra.mxu0 0.0
    %564 = vmatprep.subr.mxu0 0.0
    %565 = vmatpush1.xpose.msra.mxu0 0.0
    %566 = vmatprep.subr.mxu0 0.0
    %567 = vmatpush1.xpose.msra.mxu0 0.0
    %568 = vmatprep.subr.mxu0 0.0
    %569 = vmatpush1.xpose.msra.mxu0 0.0
    %570 = vmatprep.subr.mxu0 0.0
    %571 = vmatpush1.xpose.msra.mxu0 0.0
    %572 = vmatprep.subr.mxu0 0.0
    %573 = vmatpush1.xpose.msra.mxu0 0.0
    %574 = vmatprep.subr.mxu0 0.0
    %575 = vmatpush1.xpose.msra.mxu0 0.0
    %576 = vmatprep.subr.mxu0 0.0
    %577 = vmatpush1.xpose.msra.mxu0 0.0
    %578 = vmatprep.subr.mxu0 0.0
    %579 = vmatpush1.xpose.msra.mxu0 0.0
    %580 = vmatprep.subr.mxu0 0.0
    %581 = vmatpush1.xpose.msra.mxu0 0.0
    %582 = vmatprep.subr.mxu0 0.0
    %583 = vmatpush1.xpose.msra.mxu0 0.0
    %584 = vmatprep.subr.mxu0 0.0
    %585 = vmatpush1.xpose.msra.mxu0 0.0
    %586 = vmatprep.subr.mxu0 0.0
    %587 = vmatpush1.xpose.msra.mxu0 0.0
    %588 = vmatprep.subr.mxu0 0.0
    %589 = vmatpush1.xpose.msra.mxu0 0.0
    %590 = vmatprep.subr.mxu0 0.0
    %591 = vmatpush1.xpose.msra.mxu0 0.0
    %592 = vmatprep.mubr.f32.mxu0 0.0
    %593 = vmatmul.mubr.f32.gmra.mrb[0].mxu0 %v524
    %v594 = vpop.f32.mrb[0].mxu0
    %v595 = vadd.f32 0.0, %v594
    %v596 = vpop.f32.mrb[0].mxu0
    %597 = vdwg.mxu0
    %v598 = vmul.f32 %v517, 0.35355338
    %v599 = vmul.f32 %v595, 0.35355338
    %v600 = vsel %vm114, %v598, -inf
    %601 = vmax.xlane.f32.xlu0 %v600
    %v602 = vpop.xlane.xlu0 %601
    %v603 = vsel %vm114, %v599, -inf
    %604 = vmax.xlane.f32.xlu0 %v603
    %v605 = vpop.xlane.xlu0 %604
    %v606 = vsub.f32 %v598, %v602
    %v607 = vsub.f32 %v599, %v605
    %v608 = vmul.f32 %v606, 1.442695
    %v609 = vpow.pop %v608
    %v610 = vmul.f32 %v607, 1.442695
    %v611 = vpow.pop %v610
    %v612 = vsel %vm114, %v609, 0.0
    %613 = vadd.xlane.f32.xlu0 %v612
    %v614 = vpop.xlane.xlu0 %613
    %v615 = vsel %vm114, %v611, 0.0
    %616 = vadd.xlane.f32.xlu0 %v615
    %v617 = vpop.xlane.xlu0 %616
    %v618 = vrcp.pop %v614
    %v619 = vrcp.pop %v617
    %v620 = vmul.f32 %v609, %v618
    %v621 = vmul.f32 %v611, %v619
    %622 = vrot.lane.b32.xlu0 %v103, 56
    %v623 = vpop.permute.xlu0 %622
    %v626 = vsel %vm114, %v620, 0
    %628 = vmatprep.subr.mxu0 0.0
    %629 = vmatpush1.msra.mxu0 %v623
    %630 = vmatprep.subr.mxu0 0.0
    %631 = vmatpush1.msra.mxu0 0.0
    %632 = vmatprep.subr.mxu0 0.0
    %633 = vmatpush1.msra.mxu0 0.0
    %634 = vmatprep.subr.mxu0 0.0
    %635 = vmatpush1.msra.mxu0 0.0
    %636 = vmatprep.subr.mxu0 0.0
    %637 = vmatpush1.msra.mxu0 0.0
    %638 = vmatprep.subr.mxu0 0.0
    %639 = vmatpush1.msra.mxu0 0.0
    %640 = vmatprep.subr.mxu0 0.0
    %641 = vmatpush1.msra.mxu0 0.0
    %642 = vmatprep.subr.mxu0 0.0
    %643 = vmatpush1.msra.mxu0 0.0
    %644 = vmatprep.subr.mxu0 0.0
    %645 = vmatpush1.msra.mxu0 0.0
    %646 = vmatprep.subr.mxu0 0.0
    %647 = vmatpush1.msra.mxu0 0.0
    %648 = vmatprep.subr.mxu0 0.0
    %649 = vmatpush1.msra.mxu0 0.0
    %650 = vmatprep.subr.mxu0 0.0
    %651 = vmatpush1.msra.mxu0 0.0
    %652 = vmatprep.subr.mxu0 0.0
    %653 = vmatpush1.msra.mxu0 0.0
    %654 = vmatprep.subr.mxu0 0.0
    %655 = vmatpush1.msra.mxu0 0.0
    %656 = vmatprep.subr.mxu0 0.0
    %657 = vmatpush1.msra.mxu0 0.0
    %658 = vmatprep.subr.mxu0 0.0
    %659 = vmatpush1.msra.mxu0 0.0
    %660 = vmatprep.subr.mxu0 0.0
    %661 = vmatpush1.msra.mxu0 0.0
    %662 = vmatprep.subr.mxu0 0.0
    %663 = vmatpush1.msra.mxu0 0.0
    %664 = vmatprep.subr.mxu0 0.0
    %665 = vmatpush1.msra.mxu0 0.0
    %666 = vmatprep.subr.mxu0 0.0
    %667 = vmatpush1.msra.mxu0 0.0
    %668 = vmatprep.subr.mxu0 0.0
    %669 = vmatpush1.msra.mxu0 0.0
    %670 = vmatprep.subr.mxu0 0.0
    %671 = vmatpush1.msra.mxu0 0.0
    %672 = vmatprep.subr.mxu0 0.0
    %673 = vmatpush1.msra.mxu0 0.0
    %674 = vmatprep.subr.mxu0 0.0
    %675 = vmatpush1.msra.mxu0 0.0
    %676 = vmatprep.subr.mxu0 0.0
    %677 = vmatpush1.msra.mxu0 0.0
    %678 = vmatprep.subr.mxu0 0.0
    %679 = vmatpush1.msra.mxu0 0.0
    %680 = vmatprep.subr.mxu0 0.0
    %681 = vmatpush1.msra.mxu0 0.0
    %682 = vmatprep.subr.mxu0 0.0
    %683 = vmatpush1.msra.mxu0 0.0
    %684 = vmatprep.subr.mxu0 0.0
    %685 = vmatpush1.msra.mxu0 0.0
    %686 = vmatprep.subr.mxu0 0.0
    %687 = vmatpush1.msra.mxu0 0.0
    %688 = vmatprep.subr.mxu0 0.0
    %689 = vmatpush1.msra.mxu0 0.0
    %690 = vmatprep.subr.mxu0 0.0
    %691 = vmatpush1.msra.mxu0 0.0
    %692 = vmatprep.mubr.f32.mxu0 0.0
    %693 = vmatmul.mubr.f32.gmra.mrb[0].mxu0 %v626
    %v694 = vpop.f32.mrb[0].mxu0
    %v695 = vadd.f32 0.0, %v694
    %v696 = vpop.f32.mrb[0].mxu0
    %697 = vdwg.mxu0
    %698 = vrot.lane.b32.xlu0 %v108, 56
    %v699 = vpop.permute.xlu0 %698
    %v702 = vsel %vm114, %v621, 0
    %704 = vmatprep.subr.mxu0 0.0
    %705 = vmatpush1.msra.mxu0 %v699
    %706 = vmatprep.subr.mxu0 0.0
    %707 = vmatpush1.msra.mxu0 0.0
    %708 = vmatprep.subr.mxu0 0.0
    %709 = vmatpush1.msra.mxu0 0.0
    %710 = vmatprep.subr.mxu0 0.0
    %711 = vmatpush1.msra.mxu0 0.0
    %712 = vmatprep.subr.mxu0 0.0
    %713 = vmatpush1.msra.mxu0 0.0
    %714 = vmatprep.subr.mxu0 0.0
    %715 = vmatpush1.msra.mxu0 0.0
    %716 = vmatprep.subr.mxu0 0.0
    %717 = vmatpush1.msra.mxu0 0.0
    %718 = vmatprep.subr.mxu0 0.0
    %719 = vmatpush1.msra.mxu0 0.0
    %720 = vmatprep.subr.mxu0 0.0
    %721 = vmatpush1.msra.mxu0 0.0
    %722 = vmatprep.subr.mxu0 0.0
    %723 = vmatpush1.msra.mxu0 0.0
    %724 = vmatprep.subr.mxu0 0.0
    %725 = vmatpush1.msra.mxu0 0.0
    %726 = vmatprep.subr.mxu0 0.0
    %727 = vmatpush1.msra.mxu0 0.0
    %728 = vmatprep.subr.mxu0 0.0
    %729 = vmatpush1.msra.mxu0 0.0
    %730 = vmatprep.subr.mxu0 0.0
    %731 = vmatpush1.msra.mxu0 0.0
    %732 = vmatprep.subr.mxu0 0.0
    %733 = vmatpush1.msra.mxu0 0.0
    %734 = vmatprep.subr.mxu0 0.0
    %735 = vmatpush1.msra.mxu0 0.0
    %736 = vmatprep.subr.mxu0 0.0
    %737 = vmatpush1.msra.mxu0 0.0
    %738 = vmatprep.subr.mxu0 0.0
    %739 = vmatpush1.msra.mxu0 0.0
    %740 = vmatprep.subr.mxu0 0.0
    %741 = vmatpush1.msra.mxu0 0.0
    %742 = vmatprep.subr.mxu0 0.0
    %743 = vmatpush1.msra.mxu0 0.0
    %744 = vmatprep.subr.mxu0 0.0
    %745 = vmatpush1.msra.mxu0 0.0
    %746 = vmatprep.subr.mxu0 0.0
    %747 = vmatpush1.msra.mxu0 0.0
    %748 = vmatprep.subr.mxu0 0.0
    %749 = vmatpush1.msra.mxu0 0.0
    %750 = vmatprep.subr.mxu0 0.0
    %751 = vmatpush1.msra.mxu0 0.0
    %752 = vmatprep.subr.mxu0 0.0
    %753 = vmatpush1.msra.mxu0 0.0
    %754 = vmatprep.subr.mxu0 0.0
    %755 = vmatpush1.msra.mxu0 0.0
    %756 = vmatprep.subr.mxu0 0.0
    %757 = vmatpush1.msra.mxu0 0.0
    %758 = vmatprep.subr.mxu0 0.0
    %759 = vmatpush1.msra.mxu0 0.0
    %760 = vmatprep.subr.mxu0 0.0
    %761 = vmatpush1.msra.mxu0 0.0
    %762 = vmatprep.subr.mxu0 0.0
    %763 = vmatpush1.msra.mxu0 0.0
    %764 = vmatprep.subr.mxu0 0.0
    %765 = vmatpush1.msra.mxu0 0.0
    %766 = vmatprep.subr.mxu0 0.0
    %767 = vmatpush1.msra.mxu0 0.0
    %768 = vmatprep.mubr.f32.mxu0 0.0
    %769 = vmatmul.mubr.f32.gmra.mrb[0].mxu0 %v702
    %v770 = vpop.f32.mrb[0].mxu0
    %v771 = vadd.f32 0.0, %v770
    %v772 = vpop.f32.mrb[0].mxu0
    %773 = vdwg.mxu0
    %774 = vrot.lane.b32.xlu0 %v103, 112
    %v775 = vpop.permute.xlu0 %774
    %776 = vrot.lane.b32.xlu0 %v103, 80
    %v777 = vpop.permute.xlu0 %776
    %v778 = vsel %vm114, %v775, 0
    %v780 = vsel %vm114, %v777, 0
    %782 = vmatprep.subr.mxu0 0.0
    %783 = vmatpush1.xpose.msra.mxu0 %v780
    %784 = vmatprep.subr.mxu0 0.0
    %785 = vmatpush1.xpose.msra.mxu0 0.0
    %786 = vmatprep.subr.mxu0 0.0
    %787 = vmatpush1.xpose.msra.mxu0 0.0
    %788 = vmatprep.subr.mxu0 0.0
    %789 = vmatpush1.xpose.msra.mxu0 0.0
    %790 = vmatprep.subr.mxu0 0.0
    %791 = vmatpush1.xpose.msra.mxu0 0.0
    %792 = vmatprep.subr.mxu0 0.0
    %793 = vmatpush1.xpose.msra.mxu0 0.0
    %794 = vmatprep.subr.mxu0 0.0
    %795 = vmatpush1.xpose.msra.mxu0 0.0
    %796 = vmatprep.subr.mxu0 0.0
    %797 = vmatpush1.xpose.msra.mxu0 0.0
    %798 = vmatprep.subr.mxu0 0.0
    %799 = vmatpush1.xpose.msra.mxu0 0.0
    %800 = vmatprep.subr.mxu0 0.0
    %801 = vmatpush1.xpose.msra.mxu0 0.0
    %802 = vmatprep.subr.mxu0 0.0
    %803 = vmatpush1.xpose.msra.mxu0 0.0
    %804 = vmatprep.subr.mxu0 0.0
    %805 = vmatpush1.xpose.msra.mxu0 0.0
    %806 = vmatprep.subr.mxu0 0.0
    %807 = vmatpush1.xpose.msra.mxu0 0.0
    %808 = vmatprep.subr.mxu0 0.0
    %809 = vmatpush1.xpose.msra.mxu0 0.0
    %810 = vmatprep.subr.mxu0 0.0
    %811 = vmatpush1.xpose.msra.mxu0 0.0
    %812 = vmatprep.subr.mxu0 0.0
    %813 = vmatpush1.xpose.msra.mxu0 0.0
    %814 = vmatprep.subr.mxu0 0.0
    %815 = vmatpush1.xpose.msra.mxu0 0.0
    %816 = vmatprep.subr.mxu0 0.0
    %817 = vmatpush1.xpose.msra.mxu0 0.0
    %818 = vmatprep.subr.mxu0 0.0
    %819 = vmatpush1.xpose.msra.mxu0 0.0
    %820 = vmatprep.subr.mxu0 0.0
    %821 = vmatpush1.xpose.msra.mxu0 0.0
    %822 = vmatprep.subr.mxu0 0.0
    %823 = vmatpush1.xpose.msra.mxu0 0.0
    %824 = vmatprep.subr.mxu0 0.0
    %825 = vmatpush1.xpose.msra.mxu0 0.0
    %826 = vmatprep.subr.mxu0 0.0
    %827 = vmatpush1.xpose.msra.mxu0 0.0
    %828 = vmatprep.subr.mxu0 0.0
    %829 = vmatpush1.xpose.msra.mxu0 0.0
    %830 = vmatprep.subr.mxu0 0.0
    %831 = vmatpush1.xpose.msra.mxu0 0.0
    %832 = vmatprep.subr.mxu0 0.0
    %833 = vmatpush1.xpose.msra.mxu0 0.0
    %834 = vmatprep.subr.mxu0 0.0
    %835 = vmatpush1.xpose.msra.mxu0 0.0
    %836 = vmatprep.subr.mxu0 0.0
    %837 = vmatpush1.xpose.msra.mxu0 0.0
    %838 = vmatprep.subr.mxu0 0.0
    %839 = vmatpush1.xpose.msra.mxu0 0.0
    %840 = vmatprep.subr.mxu0 0.0
    %841 = vmatpush1.xpose.msra.mxu0 0.0
    %842 = vmatprep.subr.mxu0 0.0
    %843 = vmatpush1.xpose.msra.mxu0 0.0
    %844 = vmatprep.subr.mxu0 0.0
    %845 = vmatpush1.xpose.msra.mxu0 0.0
    %846 = vmatprep.mubr.f32.mxu0 0.0
    %847 = vmatmul.mubr.f32.gmra.mrb[0].mxu0 %v778
    %v848 = vpop.f32.mrb[0].mxu0
    %v849 = vadd.f32 0.0, %v848
    %v850 = vpop.f32.mrb[0].mxu0
    %851 = vdwg.mxu0
    %852 = vrot.lane.b32.xlu0 %v108, 112
    %v853 = vpop.permute.xlu0 %852
    %854 = vrot.lane.b32.xlu0 %v108, 80
    %v855 = vpop.permute.xlu0 %854
    %v856 = vsel %vm114, %v853, 0
    %v858 = vsel %vm114, %v855, 0
    %860 = vmatprep.subr.mxu0 0.0
    %861 = vmatpush1.xpose.msra.mxu0 %v858
    %862 = vmatprep.subr.mxu0 0.0
    %863 = vmatpush1.xpose.msra.mxu0 0.0
    %864 = vmatprep.subr.mxu0 0.0
    %865 = vmatpush1.xpose.msra.mxu0 0.0
    %866 = vmatprep.subr.mxu0 0.0
    %867 = vmatpush1.xpose.msra.mxu0 0.0
    %868 = vmatprep.subr.mxu0 0.0
    %869 = vmatpush1.xpose.msra.mxu0 0.0
    %870 = vmatprep.subr.mxu0 0.0
    %871 = vmatpush1.xpose.msra.mxu0 0.0
    %872 = vmatprep.subr.mxu0 0.0
    %873 = vmatpush1.xpose.msra.mxu0 0.0
    %874 = vmatprep.subr.mxu0 0.0
    %875 = vmatpush1.xpose.msra.mxu0 0.0
    %876 = vmatprep.subr.mxu0 0.0
    %877 = vmatpush1.xpose.msra.mxu0 0.0
    %878 = vmatprep.subr.mxu0 0.0
    %879 = vmatpush1.xpose.msra.mxu0 0.0
    %880 = vmatprep.subr.mxu0 0.0
    %881 = vmatpush1.xpose.msra.mxu0 0.0
    %882 = vmatprep.subr.mxu0 0.0
    %883 = vmatpush1.xpose.msra.mxu0 0.0
    %884 = vmatprep.subr.mxu0 0.0
    %885 = vmatpush1.xpose.msra.mxu0 0.0
    %886 = vmatprep.subr.mxu0 0.0
    %887 = vmatpush1.xpose.msra.mxu0 0.0
    %888 = vmatprep.subr.mxu0 0.0
    %889 = vmatpush1.xpose.msra.mxu0 0.0
    %890 = vmatprep.subr.mxu0 0.0
    %891 = vmatpush1.xpose.msra.mxu0 0.0
    %892 = vmatprep.subr.mxu0 0.0
    %893 = vmatpush1.xpose.msra.mxu0 0.0
    %894 = vmatprep.subr.mxu0 0.0
    %895 = vmatpush1.xpose.msra.mxu0 0.0
    %896 = vmatprep.subr.mxu0 0.0
    %897 = vmatpush1.xpose.msra.mxu0 0.0
    %898 = vmatprep.subr.mxu0 0.0
    %899 = vmatpush1.xpose.msra.mxu0 0.0
    %900 = vmatprep.subr.mxu0 0.0
    %901 = vmatpush1.xpose.msra.mxu0 0.0
    %902 = vmatprep.subr.mxu0 0.0
    %903 = vmatpush1.xpose.msra.mxu0 0.0
    %904 = vmatprep.subr.mxu0 0.0
    %905 = vmatpush1.xpose.msra.mxu0 0.0
    %906 = vmatprep.subr.mxu0 0.0
    %907 = vmatpush1.xpose.msra.mxu0 0.0
    %908 = vmatprep.subr.mxu0 0.0
    %909 = vmatpush1.xpose.msra.mxu0 0.0
    %910 = vmatprep.subr.mxu0 0.0
    %911 = vmatpush1.xpose.msra.mxu0 0.0
    %912 = vmatprep.subr.mxu0 0.0
    %913 = vmatpush1.xpose.msra.mxu0 0.0
    %914 = vmatprep.subr.mxu0 0.0
    %915 = vmatpush1.xpose.msra.mxu0 0.0
    %916 = vmatprep.subr.mxu0 0.0
    %917 = vmatpush1.xpose.msra.mxu0 0.0
    %918 = vmatprep.subr.mxu0 0.0
    %919 = vmatpush1.xpose.msra.mxu0 0.0
    %920 = vmatprep.subr.mxu0 0.0
    %921 = vmatpush1.xpose.msra.mxu0 0.0
    %922 = vmatprep.subr.mxu0 0.0
    %923 = vmatpush1.xpose.msra.mxu0 0.0
    %924 = vmatprep.mubr.f32.mxu0 0.0
    %925 = vmatmul.mubr.f32.gmra.mrb[0].mxu0 %v856
    %v926 = vpop.f32.mrb[0].mxu0
    %v927 = vadd.f32 0.0, %v926
    %v928 = vpop.f32.mrb[0].mxu0
    %929 = vdwg.mxu0
    %v930 = vmul.f32 %v849, 0.35355338
    %v931 = vmul.f32 %v927, 0.35355338
    %v932 = vsel %vm114, %v930, -inf
    %933 = vmax.xlane.f32.xlu0 %v932
    %v934 = vpop.xlane.xlu0 %933
    %v935 = vsel %vm114, %v931, -inf
    %936 = vmax.xlane.f32.xlu0 %v935
    %v937 = vpop.xlane.xlu0 %936
    %v938 = vsub.f32 %v930, %v934
    %v939 = vsub.f32 %v931, %v937
    %v940 = vmul.f32 %v938, 1.442695
    %v941 = vpow.pop %v940
    %v942 = vmul.f32 %v939, 1.442695
    %v943 = vpow.pop %v942
    %v944 = vsel %vm114, %v941, 0.0
    %945 = vadd.xlane.f32.xlu0 %v944
    %v946 = vpop.xlane.xlu0 %945
    %v947 = vsel %vm114, %v943, 0.0
    %948 = vadd.xlane.f32.xlu0 %v947
    %v949 = vpop.xlane.xlu0 %948
    %v950 = vrcp.pop %v946
    %v951 = vrcp.pop %v949
    %v952 = vmul.f32 %v941, %v950
    %v953 = vmul.f32 %v943, %v951
    %954 = vrot.lane.b32.xlu0 %v103, 48
    %v955 = vpop.permute.xlu0 %954
    %v958 = vsel %vm114, %v952, 0
    %960 = vmatprep.subr.mxu0 0.0
    %961 = vmatpush1.msra.mxu0 %v955
    %962 = vmatprep.subr.mxu0 0.0
    %963 = vmatpush1.msra.mxu0 0.0
    %964 = vmatprep.subr.mxu0 0.0
    %965 = vmatpush1.msra.mxu0 0.0
    %966 = vmatprep.subr.mxu0 0.0
    %967 = vmatpush1.msra.mxu0 0.0
    %968 = vmatprep.subr.mxu0 0.0
    %969 = vmatpush1.msra.mxu0 0.0
    %970 = vmatprep.subr.mxu0 0.0
    %971 = vmatpush1.msra.mxu0 0.0
    %972 = vmatprep.subr.mxu0 0.0
    %973 = vmatpush1.msra.mxu0 0.0
    %974 = vmatprep.subr.mxu0 0.0
    %975 = vmatpush1.msra.mxu0 0.0
    %976 = vmatprep.subr.mxu0 0.0
    %977 = vmatpush1.msra.mxu0 0.0
    %978 = vmatprep.subr.mxu0 0.0
    %979 = vmatpush1.msra.mxu0 0.0
    %980 = vmatprep.subr.mxu0 0.0
    %981 = vmatpush1.msra.mxu0 0.0
    %982 = vmatprep.subr.mxu0 0.0
    %983 = vmatpush1.msra.mxu0 0.0
    %984 = vmatprep.subr.mxu0 0.0
    %985 = vmatpush1.msra.mxu0 0.0
    %986 = vmatprep.subr.mxu0 0.0
    %987 = vmatpush1.msra.mxu0 0.0
    %988 = vmatprep.subr.mxu0 0.0
    %989 = vmatpush1.msra.mxu0 0.0
    %990 = vmatprep.subr.mxu0 0.0
    %991 = vmatpush1.msra.mxu0 0.0
    %992 = vmatprep.subr.mxu0 0.0
    %993 = vmatpush1.msra.mxu0 0.0
    %994 = vmatprep.subr.mxu0 0.0
    %995 = vmatpush1.msra.mxu0 0.0
    %996 = vmatprep.subr.mxu0 0.0
    %997 = vmatpush1.msra.mxu0 0.0
    %998 = vmatprep.subr.mxu0 0.0
    %999 = vmatpush1.msra.mxu0 0.0
    %1000 = vmatprep.subr.mxu0 0.0
    %1001 = vmatpush1.msra.mxu0 0.0
    %1002 = vmatprep.subr.mxu0 0.0
    %1003 = vmatpush1.msra.mxu0 0.0
    %1004 = vmatprep.subr.mxu0 0.0
    %1005 = vmatpush1.msra.mxu0 0.0
    %1006 = vmatprep.subr.mxu0 0.0
    %1007 = vmatpush1.msra.mxu0 0.0
    %1008 = vmatprep.subr.mxu0 0.0
    %1009 = vmatpush1.msra.mxu0 0.0
    %1010 = vmatprep.subr.mxu0 0.0
    %1011 = vmatpush1.msra.mxu0 0.0
    %1012 = vmatprep.subr.mxu0 0.0
    %1013 = vmatpush1.msra.mxu0 0.0
    %1014 = vmatprep.subr.mxu0 0.0
    %1015 = vmatpush1.msra.mxu0 0.0
    %1016 = vmatprep.subr.mxu0 0.0
    %1017 = vmatpush1.msra.mxu0 0.0
    %1018 = vmatprep.subr.mxu0 0.0
    %1019 = vmatpush1.msra.mxu0 0.0
    %1020 = vmatprep.subr.mxu0 0.0
    %1021 = vmatpush1.msra.mxu0 0.0
    %1022 = vmatprep.subr.mxu0 0.0
    %1023 = vmatpush1.msra.mxu0 0.0
    %1024 = vmatprep.mubr.f32.mxu0 0.0
    %1025 = vmatmul.mubr.f32.gmra.mrb[0].mxu0 %v958
    %v1026 = vpop.f32.mrb[0].mxu0
    %v1027 = vadd.f32 0.0, %v1026
    %v1028 = vpop.f32.mrb[0].mxu0
    %1029 = vdwg.mxu0
    %1030 = vrot.lane.b32.xlu0 %v108, 48
    %v1031 = vpop.permute.xlu0 %1030
    %v1034 = vsel %vm114, %v953, 0
    %1036 = vmatprep.subr.mxu0 0.0
    %1037 = vmatpush1.msra.mxu0 %v1031
    %1038 = vmatprep.subr.mxu0 0.0
    %1039 = vmatpush1.msra.mxu0 0.0
    %1040 = vmatprep.subr.mxu0 0.0
    %1041 = vmatpush1.msra.mxu0 0.0
    %1042 = vmatprep.subr.mxu0 0.0
    %1043 = vmatpush1.msra.mxu0 0.0
    %1044 = vmatprep.subr.mxu0 0.0
    %1045 = vmatpush1.msra.mxu0 0.0
    %1046 = vmatprep.subr.mxu0 0.0
    %1047 = vmatpush1.msra.mxu0 0.0
    %1048 = vmatprep.subr.mxu0 0.0
    %1049 = vmatpush1.msra.mxu0 0.0
    %1050 = vmatprep.subr.mxu0 0.0
    %1051 = vmatpush1.msra.mxu0 0.0
    %1052 = vmatprep.subr.mxu0 0.0
    %1053 = vmatpush1.msra.mxu0 0.0
    %1054 = vmatprep.subr.mxu0 0.0
    %1055 = vmatpush1.msra.mxu0 0.0
    %1056 = vmatprep.subr.mxu0 0.0
    %1057 = vmatpush1.msra.mxu0 0.0
    %1058 = vmatprep.subr.mxu0 0.0
    %1059 = vmatpush1.msra.mxu0 0.0
    %1060 = vmatprep.subr.mxu0 0.0
    %1061 = vmatpush1.msra.mxu0 0.0
    %1062 = vmatprep.subr.mxu0 0.0
    %1063 = vmatpush1.msra.mxu0 0.0
    %1064 = vmatprep.subr.mxu0 0.0
    %1065 = vmatpush1.msra.mxu0 0.0
    %1066 = vmatprep.subr.mxu0 0.0
    %1067 = vmatpush1.msra.mxu0 0.0
    %1068 = vmatprep.subr.mxu0 0.0
    %1069 = vmatpush1.msra.mxu0 0.0
    %1070 = vmatprep.subr.mxu0 0.0
    %1071 = vmatpush1.msra.mxu0 0.0
    %1072 = vmatprep.subr.mxu0 0.0
    %1073 = vmatpush1.msra.mxu0 0.0
    %1074 = vmatprep.subr.mxu0 0.0
    %1075 = vmatpush1.msra.mxu0 0.0
    %1076 = vmatprep.subr.mxu0 0.0
    %1077 = vmatpush1.msra.mxu0 0.0
    %1078 = vmatprep.subr.mxu0 0.0
    %1079 = vmatpush1.msra.mxu0 0.0
    %1080 = vmatprep.subr.mxu0 0.0
    %1081 = vmatpush1.msra.mxu0 0.0
    %1082 = vmatprep.subr.mxu0 0.0
    %1083 = vmatpush1.msra.mxu0 0.0
    %1084 = vmatprep.subr.mxu0 0.0
    %1085 = vmatpush1.msra.mxu0 0.0
    %1086 = vmatprep.subr.mxu0 0.0
    %1087 = vmatpush1.msra.mxu0 0.0
    %1088 = vmatprep.subr.mxu0 0.0
    %1089 = vmatpush1.msra.mxu0 0.0
    %1090 = vmatprep.subr.mxu0 0.0
    %1091 = vmatpush1.msra.mxu0 0.0
    %1092 = vmatprep.subr.mxu0 0.0
    %1093 = vmatpush1.msra.mxu0 0.0
    %1094 = vmatprep.subr.mxu0 0.0
    %1095 = vmatpush1.msra.mxu0 0.0
    %1096 = vmatprep.subr.mxu0 0.0
    %1097 = vmatpush1.msra.mxu0 0.0
    %1098 = vmatprep.subr.mxu0 0.0
    %1099 = vmatpush1.msra.mxu0 0.0
    %1100 = vmatprep.mubr.f32.mxu0 0.0
    %1101 = vmatmul.mubr.f32.gmra.mrb[0].mxu0 %v1034
    %v1102 = vpop.f32.mrb[0].mxu0
    %v1103 = vadd.f32 0.0, %v1102
    %v1104 = vpop.f32.mrb[0].mxu0
    %1105 = vdwg.mxu0
    %1106 = vrot.lane.b32.xlu0 %v103, 104
    %v1107 = vpop.permute.xlu0 %1106
    %1108 = vrot.lane.b32.xlu0 %v103, 72
    %v1109 = vpop.permute.xlu0 %1108
    %v1110 = vsel %vm114, %v1107, 0
    %v1112 = vsel %vm114, %v1109, 0
    %1114 = vmatprep.subr.mxu0 0.0
    %1115 = vmatpush1.xpose.msra.mxu0 %v1112
    %1116 = vmatprep.subr.mxu0 0.0
    %1117 = vmatpush1.xpose.msra.mxu0 0.0
    %1118 = vmatprep.subr.mxu0 0.0
    %1119 = vmatpush1.xpose.msra.mxu0 0.0
    %1120 = vmatprep.subr.mxu0 0.0
    %1121 = vmatpush1.xpose.msra.mxu0 0.0
    %1122 = vmatprep.subr.mxu0 0.0
    %1123 = vmatpush1.xpose.msra.mxu0 0.0
    %1124 = vmatprep.subr.mxu0 0.0
    %1125 = vmatpush1.xpose.msra.mxu0 0.0
    %1126 = vmatprep.subr.mxu0 0.0
    %1127 = vmatpush1.xpose.msra.mxu0 0.0
    %1128 = vmatprep.subr.mxu0 0.0
    %1129 = vmatpush1.xpose.msra.mxu0 0.0
    %1130 = vmatprep.subr.mxu0 0.0
    %1131 = vmatpush1.xpose.msra.mxu0 0.0
    %1132 = vmatprep.subr.mxu0 0.0
    %1133 = vmatpush1.xpose.msra.mxu0 0.0
    %1134 = vmatprep.subr.mxu0 0.0
    %1135 = vmatpush1.xpose.msra.mxu0 0.0
    %1136 = vmatprep.subr.mxu0 0.0
    %1137 = vmatpush1.xpose.msra.mxu0 0.0
    %1138 = vmatprep.subr.mxu0 0.0
    %1139 = vmatpush1.xpose.msra.mxu0 0.0
    %1140 = vmatprep.subr.mxu0 0.0
    %1141 = vmatpush1.xpose.msra.mxu0 0.0
    %1142 = vmatprep.subr.mxu0 0.0
    %1143 = vmatpush1.xpose.msra.mxu0 0.0
    %1144 = vmatprep.subr.mxu0 0.0
    %1145 = vmatpush1.xpose.msra.mxu0 0.0
    %1146 = vmatprep.subr.mxu0 0.0
    %1147 = vmatpush1.xpose.msra.mxu0 0.0
    %1148 = vmatprep.subr.mxu0 0.0
    %1149 = vmatpush1.xpose.msra.mxu0 0.0
    %1150 = vmatprep.subr.mxu0 0.0
    %1151 = vmatpush1.xpose.msra.mxu0 0.0
    %1152 = vmatprep.subr.mxu0 0.0
    %1153 = vmatpush1.xpose.msra.mxu0 0.0
    %1154 = vmatprep.subr.mxu0 0.0
    %1155 = vmatpush1.xpose.msra.mxu0 0.0
    %1156 = vmatprep.subr.mxu0 0.0
    %1157 = vmatpush1.xpose.msra.mxu0 0.0
    %1158 = vmatprep.subr.mxu0 0.0
    %1159 = vmatpush1.xpose.msra.mxu0 0.0
    %1160 = vmatprep.subr.mxu0 0.0
    %1161 = vmatpush1.xpose.msra.mxu0 0.0
    %1162 = vmatprep.subr.mxu0 0.0
    %1163 = vmatpush1.xpose.msra.mxu0 0.0
    %1164 = vmatprep.subr.mxu0 0.0
    %1165 = vmatpush1.xpose.msra.mxu0 0.0
    %1166 = vmatprep.subr.mxu0 0.0
    %1167 = vmatpush1.xpose.msra.mxu0 0.0
    %1168 = vmatprep.subr.mxu0 0.0
    %1169 = vmatpush1.xpose.msra.mxu0 0.0
    %1170 = vmatprep.subr.mxu0 0.0
    %1171 = vmatpush1.xpose.msra.mxu0 0.0
    %1172 = vmatprep.subr.mxu0 0.0
    %1173 = vmatpush1.xpose.msra.mxu0 0.0
    %1174 = vmatprep.subr.mxu0 0.0
    %1175 = vmatpush1.xpose.msra.mxu0 0.0
    %1176 = vmatprep.subr.mxu0 0.0
    %1177 = vmatpush1.xpose.msra.mxu0 0.0
    %1178 = vmatprep.mubr.f32.mxu0 0.0
    %1179 = vmatmul.mubr.f32.gmra.mrb[0].mxu0 %v1110
    %v1180 = vpop.f32.mrb[0].mxu0
    %v1181 = vadd.f32 0.0, %v1180
    %v1182 = vpop.f32.mrb[0].mxu0
    %1183 = vdwg.mxu0
    %1184 = vrot.lane.b32.xlu0 %v108, 104
    %v1185 = vpop.permute.xlu0 %1184
    %1186 = vrot.lane.b32.xlu0 %v108, 72
    %v1187 = vpop.permute.xlu0 %1186
    %v1188 = vsel %vm114, %v1185, 0
    %v1190 = vsel %vm114, %v1187, 0
    %1192 = vmatprep.subr.mxu0 0.0
    %1193 = vmatpush1.xpose.msra.mxu0 %v1190
    %1194 = vmatprep.subr.mxu0 0.0
    %1195 = vmatpush1.xpose.msra.mxu0 0.0
    %1196 = vmatprep.subr.mxu0 0.0
    %1197 = vmatpush1.xpose.msra.mxu0 0.0
    %1198 = vmatprep.subr.mxu0 0.0
    %1199 = vmatpush1.xpose.msra.mxu0 0.0
    %1200 = vmatprep.subr.mxu0 0.0
    %1201 = vmatpush1.xpose.msra.mxu0 0.0
    %1202 = vmatprep.subr.mxu0 0.0
    %1203 = vmatpush1.xpose.msra.mxu0 0.0
    %1204 = vmatprep.subr.mxu0 0.0
    %1205 = vmatpush1.xpose.msra.mxu0 0.0
    %1206 = vmatprep.subr.mxu0 0.0
    %1207 = vmatpush1.xpose.msra.mxu0 0.0
    %1208 = vmatprep.subr.mxu0 0.0
    %1209 = vmatpush1.xpose.msra.mxu0 0.0
    %1210 = vmatprep.subr.mxu0 0.0
    %1211 = vmatpush1.xpose.msra.mxu0 0.0
    %1212 = vmatprep.subr.mxu0 0.0
    %1213 = vmatpush1.xpose.msra.mxu0 0.0
    %1214 = vmatprep.subr.mxu0 0.0
    %1215 = vmatpush1.xpose.msra.mxu0 0.0
    %1216 = vmatprep.subr.mxu0 0.0
    %1217 = vmatpush1.xpose.msra.mxu0 0.0
    %1218 = vmatprep.subr.mxu0 0.0
    %1219 = vmatpush1.xpose.msra.mxu0 0.0
    %1220 = vmatprep.subr.mxu0 0.0
    %1221 = vmatpush1.xpose.msra.mxu0 0.0
    %1222 = vmatprep.subr.mxu0 0.0
    %1223 = vmatpush1.xpose.msra.mxu0 0.0
    %1224 = vmatprep.subr.mxu0 0.0
    %1225 = vmatpush1.xpose.msra.mxu0 0.0
    %1226 = vmatprep.subr.mxu0 0.0
    %1227 = vmatpush1.xpose.msra.mxu0 0.0
    %1228 = vmatprep.subr.mxu0 0.0
    %1229 = vmatpush1.xpose.msra.mxu0 0.0
    %1230 = vmatprep.subr.mxu0 0.0
    %1231 = vmatpush1.xpose.msra.mxu0 0.0
    %1232 = vmatprep.subr.mxu0 0.0
    %1233 = vmatpush1.xpose.msra.mxu0 0.0
    %1234 = vmatprep.subr.mxu0 0.0
    %1235 = vmatpush1.xpose.msra.mxu0 0.0
    %1236 = vmatprep.subr.mxu0 0.0
    %1237 = vmatpush1.xpose.msra.mxu0 0.0
    %1238 = vmatprep.subr.mxu0 0.0
    %1239 = vmatpush1.xpose.msra.mxu0 0.0
    %1240 = vmatprep.subr.mxu0 0.0
    %1241 = vmatpush1.xpose.msra.mxu0 0.0
    %1242 = vmatprep.subr.mxu0 0.0
    %1243 = vmatpush1.xpose.msra.mxu0 0.0
    %1244 = vmatprep.subr.mxu0 0.0
    %1245 = vmatpush1.xpose.msra.mxu0 0.0
    %1246 = vmatprep.subr.mxu0 0.0
    %1247 = vmatpush1.xpose.msra.mxu0 0.0
    %1248 = vmatprep.subr.mxu0 0.0
    %1249 = vmatpush1.xpose.msra.mxu0 0.0
    %1250 = vmatprep.subr.mxu0 0.0
    %1251 = vmatpush1.xpose.msra.mxu0 0.0
    %1252 = vmatprep.subr.mxu0 0.0
    %1253 = vmatpush1.xpose.msra.mxu0 0.0
    %1254 = vmatprep.subr.mxu0 0.0
    %1255 = vmatpush1.xpose.msra.mxu0 0.0
    %1256 = vmatprep.mubr.f32.mxu0 0.0
    %1257 = vmatmul.mubr.f32.gmra.mrb[0].mxu0 %v1188
    %v1258 = vpop.f32.mrb[0].mxu0
    %v1259 = vadd.f32 0.0, %v1258
    %v1260 = vpop.f32.mrb[0].mxu0
    %1261 = vdwg.mxu0
    %v1262 = vmul.f32 %v1181, 0.35355338
    %v1263 = vmul.f32 %v1259, 0.35355338
    %v1264 = vsel %vm114, %v1262, -inf
    %1265 = vmax.xlane.f32.xlu0 %v1264
    %v1266 = vpop.xlane.xlu0 %1265
    %v1267 = vsel %vm114, %v1263, -inf
    %1268 = vmax.xlane.f32.xlu0 %v1267
    %v1269 = vpop.xlane.xlu0 %1268
    %v1270 = vsub.f32 %v1262, %v1266
    %v1271 = vsub.f32 %v1263, %v1269
    %v1272 = vmul.f32 %v1270, 1.442695
    %v1273 = vpow.pop %v1272
    %v1274 = vmul.f32 %v1271, 1.442695
    %v1275 = vpow.pop %v1274
    %v1276 = vsel %vm114, %v1273, 0.0
    %1277 = vadd.xlane.f32.xlu0 %v1276
    %v1278 = vpop.xlane.xlu0 %1277
    %v1279 = vsel %vm114, %v1275, 0.0
    %1280 = vadd.xlane.f32.xlu0 %v1279
    %v1281 = vpop.xlane.xlu0 %1280
    %v1282 = vrcp.pop %v1278
    %v1283 = vrcp.pop %v1281
    %v1284 = vmul.f32 %v1273, %v1282
    %v1285 = vmul.f32 %v1275, %v1283
    %1286 = vrot.lane.b32.xlu0 %v103, 40
    %v1287 = vpop.permute.xlu0 %1286
    %v1290 = vsel %vm114, %v1284, 0
    %1292 = vmatprep.subr.mxu0 0.0
    %1293 = vmatpush1.msra.mxu0 %v1287
    %1294 = vmatprep.subr.mxu0 0.0
    %1295 = vmatpush1.msra.mxu0 0.0
    %1296 = vmatprep.subr.mxu0 0.0
    %1297 = vmatpush1.msra.mxu0 0.0
    %1298 = vmatprep.subr.mxu0 0.0
    %1299 = vmatpush1.msra.mxu0 0.0
    %1300 = vmatprep.subr.mxu0 0.0
    %1301 = vmatpush1.msra.mxu0 0.0
    %1302 = vmatprep.subr.mxu0 0.0
    %1303 = vmatpush1.msra.mxu0 0.0
    %1304 = vmatprep.subr.mxu0 0.0
    %1305 = vmatpush1.msra.mxu0 0.0
    %1306 = vmatprep.subr.mxu0 0.0
    %1307 = vmatpush1.msra.mxu0 0.0
    %1308 = vmatprep.subr.mxu0 0.0
    %1309 = vmatpush1.msra.mxu0 0.0
    %1310 = vmatprep.subr.mxu0 0.0
    %1311 = vmatpush1.msra.mxu0 0.0
    %1312 = vmatprep.subr.mxu0 0.0
    %1313 = vmatpush1.msra.mxu0 0.0
    %1314 = vmatprep.subr.mxu0 0.0
    %1315 = vmatpush1.msra.mxu0 0.0
    %1316 = vmatprep.subr.mxu0 0.0
    %1317 = vmatpush1.msra.mxu0 0.0
    %1318 = vmatprep.subr.mxu0 0.0
    %1319 = vmatpush1.msra.mxu0 0.0
    %1320 = vmatprep.subr.mxu0 0.0
    %1321 = vmatpush1.msra.mxu0 0.0
    %1322 = vmatprep.subr.mxu0 0.0
    %1323 = vmatpush1.msra.mxu0 0.0
    %1324 = vmatprep.subr.mxu0 0.0
    %1325 = vmatpush1.msra.mxu0 0.0
    %1326 = vmatprep.subr.mxu0 0.0
    %1327 = vmatpush1.msra.mxu0 0.0
    %1328 = vmatprep.subr.mxu0 0.0
    %1329 = vmatpush1.msra.mxu0 0.0
    %1330 = vmatprep.subr.mxu0 0.0
    %1331 = vmatpush1.msra.mxu0 0.0
    %1332 = vmatprep.subr.mxu0 0.0
    %1333 = vmatpush1.msra.mxu0 0.0
    %1334 = vmatprep.subr.mxu0 0.0
    %1335 = vmatpush1.msra.mxu0 0.0
    %1336 = vmatprep.subr.mxu0 0.0
    %1337 = vmatpush1.msra.mxu0 0.0
    %1338 = vmatprep.subr.mxu0 0.0
    %1339 = vmatpush1.msra.mxu0 0.0
    %1340 = vmatprep.subr.mxu0 0.0
    %1341 = vmatpush1.msra.mxu0 0.0
    %1342 = vmatprep.subr.mxu0 0.0
    %1343 = vmatpush1.msra.mxu0 0.0
    %1344 = vmatprep.subr.mxu0 0.0
    %1345 = vmatpush1.msra.mxu0 0.0
    %1346 = vmatprep.subr.mxu0 0.0
    %1347 = vmatpush1.msra.mxu0 0.0
    %1348 = vmatprep.subr.mxu0 0.0
    %1349 = vmatpush1.msra.mxu0 0.0
    %1350 = vmatprep.subr.mxu0 0.0
    %1351 = vmatpush1.msra.mxu0 0.0
    %1352 = vmatprep.subr.mxu0 0.0
    %1353 = vmatpush1.msra.mxu0 0.0
    %1354 = vmatprep.subr.mxu0 0.0
    %1355 = vmatpush1.msra.mxu0 0.0
    %1356 = vmatprep.mubr.f32.mxu0 0.0
    %1357 = vmatmul.mubr.f32.gmra.mrb[0].mxu0 %v1290
    %v1358 = vpop.f32.mrb[0].mxu0
    %v1359 = vadd.f32 0.0, %v1358
    %v1360 = vpop.f32.mrb[0].mxu0
    %1361 = vdwg.mxu0
    %1362 = vrot.lane.b32.xlu0 %v108, 40
    %v1363 = vpop.permute.xlu0 %1362
    %v1366 = vsel %vm114, %v1285, 0
    %1368 = vmatprep.subr.mxu0 0.0
    %1369 = vmatpush1.msra.mxu0 %v1363
    %1370 = vmatprep.subr.mxu0 0.0
    %1371 = vmatpush1.msra.mxu0 0.0
    %1372 = vmatprep.subr.mxu0 0.0
    %1373 = vmatpush1.msra.mxu0 0.0
    %1374 = vmatprep.subr.mxu0 0.0
    %1375 = vmatpush1.msra.mxu0 0.0
    %1376 = vmatprep.subr.mxu0 0.0
    %1377 = vmatpush1.msra.mxu0 0.0
    %1378 = vmatprep.subr.mxu0 0.0
    %1379 = vmatpush1.msra.mxu0 0.0
    %1380 = vmatprep.subr.mxu0 0.0
    %1381 = vmatpush1.msra.mxu0 0.0
    %1382 = vmatprep.subr.mxu0 0.0
    %1383 = vmatpush1.msra.mxu0 0.0
    %1384 = vmatprep.subr.mxu0 0.0
    %1385 = vmatpush1.msra.mxu0 0.0
    %1386 = vmatprep.subr.mxu0 0.0
    %1387 = vmatpush1.msra.mxu0 0.0
    %1388 = vmatprep.subr.mxu0 0.0
    %1389 = vmatpush1.msra.mxu0 0.0
    %1390 = vmatprep.subr.mxu0 0.0
    %1391 = vmatpush1.msra.mxu0 0.0
    %1392 = vmatprep.subr.mxu0 0.0
    %1393 = vmatpush1.msra.mxu0 0.0
    %1394 = vmatprep.subr.mxu0 0.0
    %1395 = vmatpush1.msra.mxu0 0.0
    %1396 = vmatprep.subr.mxu0 0.0
    %1397 = vmatpush1.msra.mxu0 0.0
    %1398 = vmatprep.subr.mxu0 0.0
    %1399 = vmatpush1.msra.mxu0 0.0
    %1400 = vmatprep.subr.mxu0 0.0
    %1401 = vmatpush1.msra.mxu0 0.0
    %1402 = vmatprep.subr.mxu0 0.0
    %1403 = vmatpush1.msra.mxu0 0.0
    %1404 = vmatprep.subr.mxu0 0.0
    %1405 = vmatpush1.msra.mxu0 0.0
    %1406 = vmatprep.subr.mxu0 0.0
    %1407 = vmatpush1.msra.mxu0 0.0
    %1408 = vmatprep.subr.mxu0 0.0
    %1409 = vmatpush1.msra.mxu0 0.0
    %1410 = vmatprep.subr.mxu0 0.0
    %1411 = vmatpush1.msra.mxu0 0.0
    %1412 = vmatprep.subr.mxu0 0.0
    %1413 = vmatpush1.msra.mxu0 0.0
    %1414 = vmatprep.subr.mxu0 0.0
    %1415 = vmatpush1.msra.mxu0 0.0
    %1416 = vmatprep.subr.mxu0 0.0
    %1417 = vmatpush1.msra.mxu0 0.0
    %1418 = vmatprep.subr.mxu0 0.0
    %1419 = vmatpush1.msra.mxu0 0.0
    %1420 = vmatprep.subr.mxu0 0.0
    %1421 = vmatpush1.msra.mxu0 0.0
    %1422 = vmatprep.subr.mxu0 0.0
    %1423 = vmatpush1.msra.mxu0 0.0
    %1424 = vmatprep.subr.mxu0 0.0
    %1425 = vmatpush1.msra.mxu0 0.0
    %1426 = vmatprep.subr.mxu0 0.0
    %1427 = vmatpush1.msra.mxu0 0.0
    %1428 = vmatprep.subr.mxu0 0.0
    %1429 = vmatpush1.msra.mxu0 0.0
    %1430 = vmatprep.subr.mxu0 0.0
    %1431 = vmatpush1.msra.mxu0 0.0
    %1432 = vmatprep.mubr.f32.mxu0 0.0
    %1433 = vmatmul.mubr.f32.gmra.mrb[0].mxu0 %v1366
    %v1434 = vpop.f32.mrb[0].mxu0
    %v1435 = vadd.f32 0.0, %v1434
    %v1436 = vpop.f32.mrb[0].mxu0
    %1437 = vdwg.mxu0
    %1440 = vrot.lane.b32.xlu0 %v695, 8
    %v1441 = vpop.permute.xlu0 %1440
    %1442 = vrot.lane.b32.xlu0 %v771, 8
    %v1443 = vpop.permute.xlu0 %1442
    %1448 = vrot.lane.b32.xlu0 %v1027, 16
    %v1449 = vpop.permute.xlu0 %1448
    %1450 = vrot.lane.b32.xlu0 %v1103, 16
    %v1451 = vpop.permute.xlu0 %1450
    %1456 = vrot.lane.b32.xlu0 %v1359, 24
    %v1457 = vpop.permute.xlu0 %1456
    %1458 = vrot.lane.b32.xlu0 %v1435, 24
    %v1459 = vpop.permute.xlu0 %1458
    %v1462 = vsel %vm114, %v363, %v1441
    %v1463 = vsel %vm114, %v439, %v1443
    %vm1464 = vcmask 130048
    %v1465 = vsel %vm1464, %v1462, %v1449
    %v1466 = vsel %vm1464, %v1463, %v1451
    %vm1467 = vcmask 195584
    %v1468 = vsel %vm1467, %v1465, %v1457
    %v1469 = vsel %vm1467, %v1466, %v1459
    %v1470 = vld [vmem:[%s1] sm:$0xff]
    %v1471 = vld [vmem:[%s1 + $0x10] sm:$0xff]
    %v1472 = vld [vmem:[%s1 + $0x20] sm:$0xff]
    %v1473 = vld [vmem:[%s1 + $0x30] sm:$0xff]
    %v1474 = vld [vmem:[%s2 + $0x1] sm:$0x1]
    %v1475 = vlaneseq
    %v1476 = vshrl.u32 %v1475, 7
    %v1477 = vsub.s32 0, %v1476
    %v1478 = vrot.slane %v1474, %v1477
    %1483 = vrot.lane.b32.xlu0 %v1470, 32
    %v1484 = vpop.permute.xlu0 %1483
    %1485 = vrot.lane.b32.xlu0 %v1471, 32
    %v1486 = vpop.permute.xlu0 %1485
    %1487 = vrot.lane.b32.xlu0 %v1472, 32
    %v1488 = vpop.permute.xlu0 %1487
    %1489 = vrot.lane.b32.xlu0 %v1473, 32
    %v1490 = vpop.permute.xlu0 %1489
    %v1496 = vsel %vm29, %v1468, 0
    %v1499 = vsel %vm29, %v1469, 0
    %1501 = vmatprep.subr.mxu0 0.0
    %1502 = vmatpush1.msra.mxu0 %v1484
    %1503 = vmatprep.subr.mxu0 0.0
    %1504 = vmatpush1.msra.mxu0 %v1486
    %1505 = vmatprep.subr.mxu0 0.0
    %1506 = vmatpush1.msra.mxu0 %v1488
    %1507 = vmatprep.subr.mxu0 0.0
    %1508 = vmatpush1.msra.mxu0 %v1490
    %1509 = vmatprep.subr.mxu0 0.0
    %1510 = vmatpush1.msra.mxu0 0.0
    %1511 = vmatprep.subr.mxu0 0.0
    %1512 = vmatpush1.msra.mxu0 0.0
    %1513 = vmatprep.subr.mxu0 0.0
    %1514 = vmatpush1.msra.mxu0 0.0
    %1515 = vmatprep.subr.mxu0 0.0
    %1516 = vmatpush1.msra.mxu0 0.0
    %1517 = vmatprep.subr.mxu0 0.0
    %1518 = vmatpush1.msra.mxu0 0.0
    %1519 = vmatprep.subr.mxu0 0.0
    %1520 = vmatpush1.msra.mxu0 0.0
    %1521 = vmatprep.subr.mxu0 0.0
    %1522 = vmatpush1.msra.mxu0 0.0
    %1523 = vmatprep.subr.mxu0 0.0
    %1524 = vmatpush1.msra.mxu0 0.0
    %1525 = vmatprep.subr.mxu0 0.0
    %1526 = vmatpush1.msra.mxu0 0.0
    %1527 = vmatprep.subr.mxu0 0.0
    %1528 = vmatpush1.msra.mxu0 0.0
    %1529 = vmatprep.subr.mxu0 0.0
    %1530 = vmatpush1.msra.mxu0 0.0
    %1531 = vmatprep.subr.mxu0 0.0
    %1532 = vmatpush1.msra.mxu0 0.0
    %1533 = vmatprep.subr.mxu0 0.0
    %1534 = vmatpush1.msra.mxu0 0.0
    %1535 = vmatprep.subr.mxu0 0.0
    %1536 = vmatpush1.msra.mxu0 0.0
    %1537 = vmatprep.subr.mxu0 0.0
    %1538 = vmatpush1.msra.mxu0 0.0
    %1539 = vmatprep.subr.mxu0 0.0
    %1540 = vmatpush1.msra.mxu0 0.0
    %1541 = vmatprep.subr.mxu0 0.0
    %1542 = vmatpush1.msra.mxu0 0.0
    %1543 = vmatprep.subr.mxu0 0.0
    %1544 = vmatpush1.msra.mxu0 0.0
    %1545 = vmatprep.subr.mxu0 0.0
    %1546 = vmatpush1.msra.mxu0 0.0
    %1547 = vmatprep.subr.mxu0 0.0
    %1548 = vmatpush1.msra.mxu0 0.0
    %1549 = vmatprep.subr.mxu0 0.0
    %1550 = vmatpush1.msra.mxu0 0.0
    %1551 = vmatprep.subr.mxu0 0.0
    %1552 = vmatpush1.msra.mxu0 0.0
    %1553 = vmatprep.subr.mxu0 0.0
    %1554 = vmatpush1.msra.mxu0 0.0
    %1555 = vmatprep.subr.mxu0 0.0
    %1556 = vmatpush1.msra.mxu0 0.0
    %1557 = vmatprep.subr.mxu0 0.0
    %1558 = vmatpush1.msra.mxu0 0.0
    %1559 = vmatprep.subr.mxu0 0.0
    %1560 = vmatpush1.msra.mxu0 0.0
    %1561 = vmatprep.subr.mxu0 0.0
    %1562 = vmatpush1.msra.mxu0 0.0
    %1563 = vmatprep.subr.mxu0 0.0
    %1564 = vmatpush1.msra.mxu0 0.0
    %1565 = vmatprep.mubr.f32.mxu0 0.0
    %1566 = vmatmul.mubr.f32.gmra.mrb[0].mxu0 %v1496
    %v1567 = vpop.f32.mrb[0].mxu0
    %v1568 = vadd.f32 %v1478, %v1567
    %v1569 = vpop.f32.mrb[0].mxu0
    %1570 = vmatprep.mubr.f32.mxu0 0.0
    %1571 = vmatmul.mubr.f32.gmra.mrb[0].mxu0 %v1499
    %v1572 = vpop.f32.mrb[0].mxu0
    %v1573 = vadd.f32 %v1478, %v1572
    %v1574 = vpop.f32.mrb[0].mxu0
    %1575 = vdwg.mxu0
    %v1576 = vadd.f32 %v1568, %v18
    %v1577 = vadd.f32 %v1573, %v19
    %v1578 = vld [vmem:[%s3] sm:$0x1]
    %v1579 = vlaneseq
    %v1580 = vshrl.u32 %v1579, 7
    %v1581 = vsub.s32 0, %v1580
    %v1582 = vrot.slane %v1578, %v1581
    %v1583 = vmul.f32 %v1576, %v1582
    %v1584 = vmul.f32 %v1577, %v1582
    %v1585 = vld [vmem:[%s3 + $0x1] sm:$0x1]
    %v1586 = vlaneseq
    %v1587 = vshrl.u32 %v1586, 7
    %v1588 = vsub.s32 0, %v1587
    %v1589 = vrot.slane %v1585, %v1588
    %v1590 = vadd.f32 %v1583, %v1589
    %v1591 = vadd.f32 %v1584, %v1589
    %v1592 = vld [vmem:[%s1 + $0x8] sm:$0xff]
    %v1593 = vld [vmem:[%s1 + $0x18] sm:$0xff]
    %v1594 = vld [vmem:[%s1 + $0x28] sm:$0xff]
    %v1595 = vld [vmem:[%s1 + $0x38] sm:$0xff]
    %1597 = vrot.lane.b32.xlu0 %v1478, 96
    %v1598 = vpop.permute.xlu0 %1597
    %v1601 = vsel %vm29, %v1590, 0
    %v1604 = vsel %vm29, %v1591, 0
    %1606 = vmatprep.subr.mxu0 0.0
    %1607 = vmatpush1.msra.mxu0 %v1592
    %1608 = vmatprep.subr.mxu0 0.0
    %1609 = vmatpush1.msra.mxu0 %v1593
    %1610 = vmatprep.subr.mxu0 0.0
    %1611 = vmatpush1.msra.mxu0 %v1594
    %1612 = vmatprep.subr.mxu0 0.0
    %1613 = vmatpush1.msra.mxu0 %v1595
    %1614 = vmatprep.subr.mxu0 0.0
    %1615 = vmatpush1.msra.mxu0 0.0
    %1616 = vmatprep.subr.mxu0 0.0
    %1617 = vmatpush1.msra.mxu0 0.0
    %1618 = vmatprep.subr.mxu0 0.0
    %1619 = vmatpush1.msra.mxu0 0.0
    %1620 = vmatprep.subr.mxu0 0.0
    %1621 = vmatpush1.msra.mxu0 0.0
    %1622 = vmatprep.subr.mxu0 0.0
    %1623 = vmatpush1.msra.mxu0 0.0
    %1624 = vmatprep.subr.mxu0 0.0
    %1625 = vmatpush1.msra.mxu0 0.0
    %1626 = vmatprep.subr.mxu0 0.0
    %1627 = vmatpush1.msra.mxu0 0.0
    %1628 = vmatprep.subr.mxu0 0.0
    %1629 = vmatpush1.msra.mxu0 0.0
    %1630 = vmatprep.subr.mxu0 0.0
    %1631 = vmatpush1.msra.mxu0 0.0
    %1632 = vmatprep.subr.mxu0 0.0
    %1633 = vmatpush1.msra.mxu0 0.0
    %1634 = vmatprep.subr.mxu0 0.0
    %1635 = vmatpush1.msra.mxu0 0.0
    %1636 = vmatprep.subr.mxu0 0.0
    %1637 = vmatpush1.msra.mxu0 0.0
    %1638 = vmatprep.subr.mxu0 0.0
    %1639 = vmatpush1.msra.mxu0 0.0
    %1640 = vmatprep.subr.mxu0 0.0
    %1641 = vmatpush1.msra.mxu0 0.0
    %1642 = vmatprep.subr.mxu0 0.0
    %1643 = vmatpush1.msra.mxu0 0.0
    %1644 = vmatprep.subr.mxu0 0.0
    %1645 = vmatpush1.msra.mxu0 0.0
    %1646 = vmatprep.subr.mxu0 0.0
    %1647 = vmatpush1.msra.mxu0 0.0
    %1648 = vmatprep.subr.mxu0 0.0
    %1649 = vmatpush1.msra.mxu0 0.0
    %1650 = vmatprep.subr.mxu0 0.0
    %1651 = vmatpush1.msra.mxu0 0.0
    %1652 = vmatprep.subr.mxu0 0.0
    %1653 = vmatpush1.msra.mxu0 0.0
    %1654 = vmatprep.subr.mxu0 0.0
    %1655 = vmatpush1.msra.mxu0 0.0
    %1656 = vmatprep.subr.mxu0 0.0
    %1657 = vmatpush1.msra.mxu0 0.0
    %1658 = vmatprep.subr.mxu0 0.0
    %1659 = vmatpush1.msra.mxu0 0.0
    %1660 = vmatprep.subr.mxu0 0.0
    %1661 = vmatpush1.msra.mxu0 0.0
    %1662 = vmatprep.subr.mxu0 0.0
    %1663 = vmatpush1.msra.mxu0 0.0
    %1664 = vmatprep.subr.mxu0 0.0
    %1665 = vmatpush1.msra.mxu0 0.0
    %1666 = vmatprep.subr.mxu0 0.0
    %1667 = vmatpush1.msra.mxu0 0.0
    %1668 = vmatprep.subr.mxu0 0.0
    %1669 = vmatpush1.msra.mxu0 0.0
    %1670 = vmatprep.mubr.f32.mxu0 0.0
    %1671 = vmatmul.mubr.f32.gmra.mrb[0].mxu0 %v1601
    %v1672 = vpop.f32.mrb[0].mxu0
    %v1673 = vadd.f32 %v1598, %v1672
    %v1674 = vpop.f32.mrb[0].mxu0
    %1675 = vmatprep.mubr.f32.mxu0 0.0
    %1676 = vmatmul.mubr.f32.gmra.mrb[0].mxu0 %v1604
    %v1677 = vpop.f32.mrb[0].mxu0
    %v1678 = vadd.f32 %v1598, %v1677
    %v1679 = vpop.f32.mrb[0].mxu0
    %1680 = vdwg.mxu0
    %v1681 = vmax.f32 %v1673, 0.0
    %v1682 = vmax.f32 %v1678, 0.0
    %1687 = vrot.lane.b32.xlu0 %v1592, 96
    %v1688 = vpop.permute.xlu0 %1687
    %1689 = vrot.lane.b32.xlu0 %v1593, 96
    %v1690 = vpop.permute.xlu0 %1689
    %1691 = vrot.lane.b32.xlu0 %v1594, 96
    %v1692 = vpop.permute.xlu0 %1691
    %1693 = vrot.lane.b32.xlu0 %v1595, 96
    %v1694 = vpop.permute.xlu0 %1693
    %1699 = vrot.lane.b32.xlu0 %v1478, 64
    %v1700 = vpop.permute.xlu0 %1699
    %v1703 = vsel %vm29, %v1681, 0
    %v1706 = vsel %vm29, %v1682, 0
    %1708 = vmatprep.subr.mxu0 0.0
    %1709 = vmatpush1.msra.mxu0 %v1688
    %1710 = vmatprep.subr.mxu0 0.0
    %1711 = vmatpush1.msra.mxu0 %v1690
    %1712 = vmatprep.subr.mxu0 0.0
    %1713 = vmatpush1.msra.mxu0 %v1692
    %1714 = vmatprep.subr.mxu0 0.0
    %1715 = vmatpush1.msra.mxu0 %v1694
    %1716 = vmatprep.subr.mxu0 0.0
    %1717 = vmatpush1.msra.mxu0 0.0
    %1718 = vmatprep.subr.mxu0 0.0
    %1719 = vmatpush1.msra.mxu0 0.0
    %1720 = vmatprep.subr.mxu0 0.0
    %1721 = vmatpush1.msra.mxu0 0.0
    %1722 = vmatprep.subr.mxu0 0.0
    %1723 = vmatpush1.msra.mxu0 0.0
    %1724 = vmatprep.subr.mxu0 0.0
    %1725 = vmatpush1.msra.mxu0 0.0
    %1726 = vmatprep.subr.mxu0 0.0
    %1727 = vmatpush1.msra.mxu0 0.0
    %1728 = vmatprep.subr.mxu0 0.0
    %1729 = vmatpush1.msra.mxu0 0.0
    %1730 = vmatprep.subr.mxu0 0.0
    %1731 = vmatpush1.msra.mxu0 0.0
    %1732 = vmatprep.subr.mxu0 0.0
    %1733 = vmatpush1.msra.mxu0 0.0
    %1734 = vmatprep.subr.mxu0 0.0
    %1735 = vmatpush1.msra.mxu0 0.0
    %1736 = vmatprep.subr.mxu0 0.0
    %1737 = vmatpush1.msra.mxu0 0.0
    %1738 = vmatprep.subr.mxu0 0.0
    %1739 = vmatpush1.msra.mxu0 0.0
    %1740 = vmatprep.subr.mxu0 0.0
    %1741 = vmatpush1.msra.mxu0 0.0
    %1742 = vmatprep.subr.mxu0 0.0
    %1743 = vmatpush1.msra.mxu0 0.0
    %1744 = vmatprep.subr.mxu0 0.0
    %1745 = vmatpush1.msra.mxu0 0.0
    %1746 = vmatprep.subr.mxu0 0.0
    %1747 = vmatpush1.msra.mxu0 0.0
    %1748 = vmatprep.subr.mxu0 0.0
    %1749 = vmatpush1.msra.mxu0 0.0
    %1750 = vmatprep.subr.mxu0 0.0
    %1751 = vmatpush1.msra.mxu0 0.0
    %1752 = vmatprep.subr.mxu0 0.0
    %1753 = vmatpush1.msra.mxu0 0.0
    %1754 = vmatprep.subr.mxu0 0.0
    %1755 = vmatpush1.msra.mxu0 0.0
    %1756 = vmatprep.subr.mxu0 0.0
    %1757 = vmatpush1.msra.mxu0 0.0
    %1758 = vmatprep.subr.mxu0 0.0
    %1759 = vmatpush1.msra.mxu0 0.0
    %1760 = vmatprep.subr.mxu0 0.0
    %1761 = vmatpush1.msra.mxu0 0.0
    %1762 = vmatprep.subr.mxu0 0.0
    %1763 = vmatpush1.msra.mxu0 0.0
    %1764 = vmatprep.subr.mxu0 0.0
    %1765 = vmatpush1.msra.mxu0 0.0
    %1766 = vmatprep.subr.mxu0 0.0
    %1767 = vmatpush1.msra.mxu0 0.0
    %1768 = vmatprep.subr.mxu0 0.0
    %1769 = vmatpush1.msra.mxu0 0.0
    %1770 = vmatprep.subr.mxu0 0.0
    %1771 = vmatpush1.msra.mxu0 0.0
    %1772 = vmatprep.mubr.f32.mxu0 0.0
    %1773 = vmatmul.mubr.f32.gmra.mrb[0].mxu0 %v1703
    %v1774 = vpop.f32.mrb[0].mxu0
    %v1775 = vadd.f32 %v1700, %v1774
    %v1776 = vpop.f32.mrb[0].mxu0
    %1777 = vmatprep.mubr.f32.mxu0 0.0
    %1778 = vmatmul.mubr.f32.gmra.mrb[0].mxu0 %v1706
    %v1779 = vpop.f32.mrb[0].mxu0
    %v1780 = vadd.f32 %v1700, %v1779
    %v1781 = vpop.f32.mrb[0].mxu0
    %1782 = vdwg.mxu0
    %v1783 = vadd.f32 %v1775, %v1590
    %v1784 = vadd.f32 %v1780, %v1591
    %v1785 = vld [vmem:[%s3 + $0x2] sm:$0x1]
    %v1786 = vlaneseq
    %v1787 = vshrl.u32 %v1786, 7
    %v1788 = vsub.s32 0, %v1787
    %v1789 = vrot.slane %v1785, %v1788
    %v1790 = vmul.f32 %v1783, %v1789
    %v1791 = vmul.f32 %v1784, %v1789
    %v1792 = vld [vmem:[%s3 + $0x3] sm:$0x1]
    %v1793 = vlaneseq
    %v1794 = vshrl.u32 %v1793, 7
    %v1795 = vsub.s32 0, %v1794
    %v1796 = vrot.slane %v1792, %v1795
    %v1797 = vadd.f32 %v1790, %v1796
    %v1798 = vadd.f32 %v1791, %v1796
    %1799 = vst.msk [vmem:[#allocation2] sm:$0xff] %vm29, %v1797
    %1800 = vst.msk [vmem:[#allocation2 + $0x8] sm:$0xff] %vm29, %v1798
    // Predicated region
    $region18: #{gat_layer_pallas.1} parent=1 // pred_check
      _
    $region19: #{gat_layer_pallas.1} parent=1 // pred_check_branch
      %1802 = sbr.rel (0) target = $region21
    $region20: #{gat_layer_pallas.1} parent=1 // pred_region
      %s1804 = ssub.s32 256, 256
      %1805 = vsyncadd [#allocation3], %s1804
      %s1806 = sshll.u32 [#allocation2], 4
      %s1807 = int_to_ptr.vmem [resolvable:$true] %s1806
      %1812 = dma.vmem_to_hbm [thread:$0]  %s1807, 256, %s4, [#allocation3], 128, 128, 8
    $region21: #{gat_layer_pallas.1} parent=1 // pred_fallthru
      _
    // Predicated region
    $region22: #{gat_layer_pallas.1} parent=1 // pred_check
      _
    $region23: #{gat_layer_pallas.1} parent=1 // pred_check_branch
      %1814 = sbr.rel (0) target = $region25
    $region24: #{gat_layer_pallas.1} parent=1 // pred_region
      %1815 = dma.done [#allocation3], 256
    $region25: #{gat_layer_pallas.1} parent=1 // pred_fallthru
      _
    %1816 = vsyncpa [#allocation3], 1

</llo_original>
